<compile_context>
chip_gen: v7x
topology: tpu7x:2x2x1
jax: 0.10.0
libtpu: 0.0.40
codegen_flags: <defaults>
</compile_context>

<pallas_src>
import functools
import math

import jax
import jax.numpy as jnp
from jax import lax
from jax.experimental import pallas as pl
from jax.experimental.pallas import tpu as pltpu


# ---------------------------------------------------------------------------
# Kernels
# ---------------------------------------------------------------------------

def _proj_kernel(x_ref, w_ref, b_ref, th_ref, kv_ref):
    """Fused theta/phi/g 1x1-conv projection for one (batch, row-tile).

    x_ref : (1, tn, Cp)     bf16
    w_ref : (Cp, 3*Cip)     bf16   [theta | phi | g], pre-transposed
    b_ref : (1, 3*Cip)      f32
    th_ref: (1, tn, Cip)    bf16 out
    kv_ref: (1, tn, 2*Cip)  bf16 out  ([phi | g])
    """
    cip = th_ref.shape[-1]
    p = jnp.dot(x_ref[0], w_ref[...],
                preferred_element_type=jnp.float32) + b_ref[...]
    th_ref[0] = p[:, :cip].astype(th_ref.dtype)
    kv_ref[0] = p[:, cip:].astype(kv_ref.dtype)


def _flash_kernel(n_valid, needs_mask,
                  xq_ref, th_ref, kv_ref, ww_ref, bw_ref, o_ref,
                  m_s, l_s, acc_s):
    """One (batch, q-tile, k-tile) step of the online-softmax non-local block.

    xq_ref: (1, tq, Cp)      f32  (residual input, constant over ki)
    th_ref: (1, tq, Cip)     bf16 (theta, constant over ki)
    kv_ref: (1, tk, 2*Cip)   bf16 ([phi | g], streamed over ki)
    ww_ref: (Cip, Cp)        bf16 (W with eval BN folded, pre-transposed)
    bw_ref: (1, Cp)          f32
    """
    ki = pl.program_id(2)
    nk = pl.num_programs(2)
    cip = th_ref.shape[-1]
    tk = kv_ref.shape[1]

    # ---- init online-softmax state once per (b, q-tile) --------------------
    @pl.when(ki == 0)
    def _():
        m_s[...] = jnp.full(m_s.shape, -jnp.inf, dtype=m_s.dtype)
        l_s[...] = jnp.zeros(l_s.shape, dtype=l_s.dtype)
        acc_s[...] = jnp.zeros(acc_s.shape, dtype=acc_s.dtype)

    kv = kv_ref[0]                        # (tk, 2*Cip) bf16
    phi = kv[:, :cip]                     # (tk, Cip)
    g = kv[:, cip:]                       # (tk, Cip)

    # ---- attention logits: contract Ci axes (no transpose materialized) ----
    s = lax.dot_general(th_ref[0], phi,
                        dimension_numbers=(((1,), (1,)), ((), ())),
                        preferred_element_type=jnp.float32)     # (tq, tk)

    # ---- mask padded key columns (only traced when N was padded) -----------
    if needs_mask:
        col = ki * tk + lax.broadcasted_iota(jnp.int32, s.shape, 1)
        s = jnp.where(col < n_valid, s, -1e30)

    # ---- online softmax update (all f32) ------------------------------------
    m_new = jnp.maximum(m_s[...], jnp.max(s, axis=-1, keepdims=True))
    alpha = jnp.exp(m_s[...] - m_new)
    p = jnp.exp(s - m_new)
    l_s[...] = alpha * l_s[...] + jnp.sum(p, axis=-1, keepdims=True)
    acc_s[...] = alpha * acc_s[...] + jnp.dot(
        p.astype(jnp.bfloat16), g, preferred_element_type=jnp.float32)
    m_s[...] = m_new

    # ---- finalize: normalize, W projection (+ folded BN), residual ----------
    @pl.when(ki == nk - 1)
    def _():
        y = acc_s[...] * pl.reciprocal(l_s[...], approx=True)   # (tq, Cip)
        w_y = jnp.dot(y.astype(jnp.bfloat16), ww_ref[...],
                      preferred_element_type=jnp.float32) + bw_ref[...]
        o_ref[0] = (w_y + xq_ref[0]).astype(o_ref.dtype)


# ---------------------------------------------------------------------------
# Wrapper
# ---------------------------------------------------------------------------

def _round_up(x, m):
    return (x + m - 1) // m * m


def _pick_tile(n, requested):
    if requested is not None:
        assert requested % 8 == 0, "tile must be a multiple of 8"
        return requested
    # Prefer large tiles (per-grid-step overhead ~0.35us) but keep the
    # padding overhead of non-divisible N under ~12.5%.
    for cand in (1024, 512, 256, 128):
        npad = _round_up(n, cand)
        if (npad - n) * 8 <= npad:
            return cand
    return 128


@functools.partial(jax.jit, static_argnames=("tq", "tk"))
def nonlocal_block(x_nchw, params, *, tq=None, tk=None):
    """x_nchw: (B, C, H, W) float32.  Returns (B, C, H, W) float32."""
    B, C, H, W = x_nchw.shape
    N = H * W
    Ci = params["w_theta"].shape[0]

    Cp = _round_up(C, 128)          # padded in_channels   (lane-dense)
    Cip = _round_up(Ci, 128)        # padded inter_channels (lane-dense)

    tq = _pick_tile(N, tq)
    tk = _pick_tile(N, tk)
    # v7x has 2 TensorCores: guarantee >= 2 units of "parallel" grid work.
    while tq > 128 and B * (_round_up(N, tq) // tq) < 2:
        tq //= 2
    lcm = tq * tk // math.gcd(tq, tk)
    Np = _round_up(N, lcm)          # padded spatial extent
    needs_mask = Np != N

    f32, bf16 = jnp.float32, jnp.bfloat16

    # NCHW -> (B, Np, Cp), channel-minor, zero-padded rows/channels.
    x = jnp.transpose(x_nchw, (0, 2, 3, 1)).reshape(B, N, C)
    if Np != N or Cp != C:
        x = jnp.pad(x, ((0, 0), (0, Np - N), (0, Cp - C)))
    x_bf16 = x.astype(bf16)         # projection input (halves its DMA stream)
    # x stays f32 for the residual add (read once per element, exact parity).

    # Fold eval-mode BatchNorm2d into the W 1x1 conv (pure parameter algebra):
    #   bn(z) = gamma * (z - mean) / sqrt(var + eps) + beta
    scale = params["bn_gamma"] / jnp.sqrt(params["bn_var"] + 1e-5)       # (C,)
    ww_eff = params["w_w"] * scale[:, None]                              # (C, Ci)
    bw_eff = (params["b_w"] - params["bn_mean"]) * scale + params["bn_beta"]

    # Pre-transposed, zero-padded, bf16 weights (no in-kernel transposes/casts).
    w_all = (jnp.zeros((Cp, 3 * Cip), f32)
             .at[:C, :Ci].set(params["w_theta"].T)
             .at[:C, Cip:Cip + Ci].set(params["w_phi"].T)
             .at[:C, 2 * Cip:2 * Cip + Ci].set(params["w_g"].T)).astype(bf16)
    b_all = (jnp.zeros((1, 3 * Cip), f32)
             .at[0, :Ci].set(params["b_theta"])
             .at[0, Cip:Cip + Ci].set(params["b_phi"])
             .at[0, 2 * Cip:2 * Cip + Ci].set(params["b_g"]))
    ww = (jnp.zeros((Cip, Cp), f32).at[:Ci, :C].set(ww_eff.T)).astype(bf16)
    bw = jnp.zeros((1, Cp), f32).at[0, :C].set(bw_eff)

    tn = tq                         # projection row-tile (Np is a multiple)

    # ---------------- projection kernel: theta / [phi|g] --------------------
    proj_est = (2 * (tn * Cp * 2 + Cp * 3 * Cip * 2 + 3 * Cip * 4
                     + tn * Cip * 2 + tn * 2 * Cip * 2)
                + tn * 3 * Cip * 4)
    proj_vmem = int(min(48 * 2**20, max(32 * 2**20, int(1.25 * proj_est))))

    theta, kv = pl.pallas_call(
        _proj_kernel,
        out_shape=(jax.ShapeDtypeStruct((B, Np, Cip), bf16),
                   jax.ShapeDtypeStruct((B, Np, 2 * Cip), bf16)),
        grid_spec=pltpu.PrefetchScalarGridSpec(
            num_scalar_prefetch=0,
            grid=(B, Np // tn),
            in_specs=[
                pl.BlockSpec((1, tn, Cp), lambda b, i: (b, i, 0)),       # x bf16
                pl.BlockSpec((Cp, 3 * Cip), lambda b, i: (0, 0)),        # [wth|wphi|wg]^T
                pl.BlockSpec((1, 3 * Cip), lambda b, i: (0, 0)),         # biases
            ],
            out_specs=(
                pl.BlockSpec((1, tn, Cip), lambda b, i: (b, i, 0)),      # theta
                pl.BlockSpec((1, tn, 2 * Cip), lambda b, i: (b, i, 0)),  # [phi|g]
            )),
        compiler_params=pltpu.CompilerParams(
            dimension_semantics=("parallel", "parallel"),
            vmem_limit_bytes=proj_vmem),
    )(x_bf16, w_all, b_all)

    # ---------------- flash attention + W projection + residual -------------
    flash_est = (
        2 * (tq * Cp * 4 + tq * Cip * 2 + tk * 2 * Cip * 2 + tq * Cp * 4)  # blocks x2 buf
        + 2 * (Cip * Cp * 2 + Cp * 4)                                      # const weights
        + tq * Cip * 4 + 2 * tq * 4                                        # scratch
        + tq * tk * 16)                                                    # s, p, p_bf16, mask
    flash_vmem = int(min(48 * 2**20, max(32 * 2**20, int(1.25 * flash_est))))

    out = pl.pallas_call(
        functools.partial(_flash_kernel, N, needs_mask),
        out_shape=jax.ShapeDtypeStruct((B, Np, Cp), f32),
        grid_spec=pltpu.PrefetchScalarGridSpec(
            num_scalar_prefetch=0,
            grid=(B, Np // tq, Np // tk),
            in_specs=[
                pl.BlockSpec((1, tq, Cp), lambda b, qi, ki: (b, qi, 0)),        # x (residual)
                pl.BlockSpec((1, tq, Cip), lambda b, qi, ki: (b, qi, 0)),       # theta
                pl.BlockSpec((1, tk, 2 * Cip), lambda b, qi, ki: (b, ki, 0)),   # [phi|g]
                pl.BlockSpec((Cip, Cp), lambda b, qi, ki: (0, 0)),              # w_W^T (BN folded)
                pl.BlockSpec((1, Cp), lambda b, qi, ki: (0, 0)),                # b_W  (BN folded)
            ],
            out_specs=pl.BlockSpec((1, tq, Cp), lambda b, qi, ki: (b, qi, 0)),
            scratch_shapes=[
                pltpu.VMEM((tq, 1), jnp.float32),     # running max
                pltpu.VMEM((tq, 1), jnp.float32),     # running sum
                pltpu.VMEM((tq, Cip), jnp.float32),   # output accumulator
            ]),
        compiler_params=pltpu.CompilerParams(
            dimension_semantics=("parallel", "parallel", "arbitrary"),
            vmem_limit_bytes=flash_vmem),
    )(x, theta, kv, ww, bw)

    # Drop row/channel padding -> NCHW.
    return jnp.transpose(out[:, :N, :C].reshape(B, H, W, C), (0, 3, 1, 2))


# ---------------------------------------------------------------------------
# Pure-JAX reference + parameter construction (for verification)
# ---------------------------------------------------------------------------

def _reference(x_nchw, params):
    """Pure-JAX f32 reference mirroring the PyTorch forward."""
    B, C, H, W = x_nchw.shape
    N = H * W
    x = x_nchw.reshape(B, C, N)                                     # (B, C, N)

    def conv1x1(w, b, inp):                                         # w: (O, I)
        return jnp.einsum('oi,bin->bon', w, inp) + b[None, :, None]

    g_x = conv1x1(params["w_g"], params["b_g"], x)                  # (B, Ci, N)
    theta_x = conv1x1(params["w_theta"], params["b_theta"], x)
    phi_x = conv1x1(params["w_phi"], params["b_phi"], x)

    theta_t = jnp.transpose(theta_x, (0, 2, 1))                     # (B, N, Ci)
    f = jnp.matmul(theta_t, phi_x)                                  # (B, N, N)
    f_div_c = jax.nn.softmax(f, axis=-1)
    y = jnp.matmul(f_div_c, jnp.transpose(g_x, (0, 2, 1)))          # (B, N, Ci)
    y = jnp.transpose(y, (0, 2, 1))                                 # (B, Ci, N)

    w_y = conv1x1(params["w_w"], params["b_w"], y)                  # (B, C, N)
    scale = params["bn_gamma"] / jnp.sqrt(params["bn_var"] + 1e-5)
    w_y = (w_y - params["bn_mean"][None, :, None]) * scale[None, :, None] \
          + params["bn_beta"][None, :, None]
    z = w_y + x
    return z.reshape(B, C, H, W)


def make_params(key, in_channels):
    inter = in_channels // 2
    if inter == 0:
        inter = 1
    ks = jax.random.split(key, 8)
    s = 0.1
    return {
        "w_g": jax.random.normal(ks[0], (inter, in_channels), jnp.float32) * s,
        "b_g": jax.random.normal(ks[1], (inter,), jnp.float32) * s,
        "w_theta": jax.random.normal(ks[2], (inter, in_channels), jnp.float32) * s,
        "b_theta": jax.random.normal(ks[3], (inter,), jnp.float32) * s,
        "w_phi": jax.random.normal(ks[4], (inter, in_channels), jnp.float32) * s,
        "b_phi": jax.random.normal(ks[5], (inter,), jnp.float32) * s,
        "w_w": jax.random.normal(ks[6], (in_channels, inter), jnp.float32) * s,
        "b_w": jax.random.normal(ks[7], (in_channels,), jnp.float32) * s,
        # NOTE: the PyTorch __init__ zero-initializes BN gamma/beta (gating W_y
        # to zero at init).  Nonzero deterministic values here exercise the
        # full compute path; semantics are identical.
        "bn_gamma": jnp.full((in_channels,), 0.5, jnp.float32),
        "bn_beta": jnp.full((in_channels,), 0.1, jnp.float32),
        "bn_mean": jnp.zeros((in_channels,), jnp.float32),
        "bn_var": jnp.ones((in_channels,), jnp.float32),
    }


if __name__ == "__main__":
    key = jax.random.PRNGKey(0)
    kx, kp, kx2 = jax.random.split(key, 3)

    # Case 1: N divisible by the tile -> exercises the multi-tile flash path
    # (grid = (2, 2, 2) with tq=tk=128, no masking).
    B, C, H, W = 2, 4, 16, 16          # N = 256
    x = jax.random.normal(kx, (B, C, H, W), jnp.float32)
    params = make_params(kp, C)
    z = jax.block_until_ready(nonlocal_block(x, params, tq=128, tk=128))
    z_ref = _reference(x, params)
    assert z.shape == (B, C, H, W)
    # bf16 MXU operands (f32 accumulation) -> looser tolerance than pure f32.
    assert jnp.allclose(z, z_ref, atol=2e-2, rtol=2e-2), \
        f"case1 max abs err = {jnp.max(jnp.abs(z - z_ref))}"

    # Case 2: N = 144 (not a multiple of 128) -> exercises row padding and
    # padded-key-column masking (grid = (1, 2, 2), last key tile 16/128 valid).
    B2, C2, H2, W2 = 1, 4, 12, 12
    x2 = jax.random.normal(kx2, (B2, C2, H2, W2), jnp.float32)
    params2 = make_params(jax.random.PRNGKey(1), C2)
    z2 = jax.block_until_ready(nonlocal_block(x2, params2, tq=128, tk=128))
    z2_ref = _reference(x2, params2)
    assert z2.shape == (B2, C2, H2, W2)
    assert jnp.allclose(z2, z2_ref, atol=2e-2, rtol=2e-2), \
        f"case2 max abs err = {jnp.max(jnp.abs(z2 - z2_ref))}"

    print("KERNEL_OK")
</pallas_src>

<mosaic_0001>
module attributes {stable_mosaic.version = 11 : i64} {
  func.func @_proj_kernel(%arg0: i32, %arg1: i32, %arg2: memref<1x128x128xbf16, #tpu.memory_space<vmem>>, %arg3: memref<128x384xbf16, #tpu.memory_space<vmem>>, %arg4: memref<1x384xf32, #tpu.memory_space<vmem>>, %arg5: memref<1x128x128xbf16, #tpu.memory_space<vmem>>, %arg6: memref<1x128x256xbf16, #tpu.memory_space<vmem>>) attributes {dimension_semantics = [#tpu.dimension_semantics<parallel>, #tpu.dimension_semantics<parallel>], iteration_bounds = array<i64: 2, 2>, scalar_prefetch = 0 : i64, scratch_operands = 0 : i64, tpu.core_type = #tpu.core_type<tc>, window_params = [{transform_indices = @transform_0, window_bounds = array<i64: 1, 128, 128>}, {pipeline_mode = #tpu.pipeline_mode<synchronous>, transform_indices = @transform_1, window_bounds = array<i64: 128, 384>}, {pipeline_mode = #tpu.pipeline_mode<synchronous>, transform_indices = @transform_2, window_bounds = array<i64: 1, 384>}, {transform_indices = @transform_3, window_bounds = array<i64: 1, 128, 128>}, {transform_indices = @transform_4, window_bounds = array<i64: 1, 128, 256>}]} {
    %c0 = arith.constant 0 : index
    %c0_0 = arith.constant 0 : index
    %c0_1 = arith.constant 0 : index
    %0 = vector.load %arg2[%c0, %c0_0, %c0_1] : memref<1x128x128xbf16, #tpu.memory_space<vmem>>, vector<1x128x128xbf16>
    %1 = vector.shape_cast %0 : vector<1x128x128xbf16> to vector<128x128xbf16>
    %c0_2 = arith.constant 0 : index
    %c0_3 = arith.constant 0 : index
    %2 = vector.load %arg3[%c0_2, %c0_3] : memref<128x384xbf16, #tpu.memory_space<vmem>>, vector<128x384xbf16>
    %cst = arith.constant dense<0.000000e+00> : vector<128x384xf32>
    %3 = tpu.matmul %1, %2, %cst {dimension_numbers = #tpu.dot_dimension_numbers<[1], [0], [0], [1], [0, 0, 1, 1], [], []>} : vector<128x128xbf16>, vector<128x384xbf16>, vector<128x384xf32> -> vector<128x384xf32>
    %c0_4 = arith.constant 0 : index
    %c0_5 = arith.constant 0 : index
    %4 = vector.load %arg4[%c0_4, %c0_5] : memref<1x384xf32, #tpu.memory_space<vmem>>, vector<1x384xf32>
    %5 = vector.broadcast %4 : vector<1x384xf32> to vector<128x384xf32>
    %6 = arith.addf %3, %5 : vector<128x384xf32>
    %7 = vector.extract_strided_slice %6 {offsets = [0, 0], sizes = [128, 128], strides = [1, 1]} : vector<128x384xf32> to vector<128x128xf32>
    %8 = arith.truncf %7 : vector<128x128xf32> to vector<128x128xbf16>
    %c0_6 = arith.constant 0 : index
    %c0_7 = arith.constant 0 : index
    %c0_8 = arith.constant 0 : index
    %9 = vector.load %arg5[%c0_6, %c0_7, %c0_8] : memref<1x128x128xbf16, #tpu.memory_space<vmem>>, vector<1x128x128xbf16>
    %10 = vector.shape_cast %9 : vector<1x128x128xbf16> to vector<128x128xbf16>
    %11 = vector.shape_cast %8 : vector<128x128xbf16> to vector<1x128x128xbf16>
    tpu.vector_store %arg5[%c0_6, %c0_7, %c0_8], %11 {strides = array<i32>} : memref<1x128x128xbf16, #tpu.memory_space<vmem>>, vector<1x128x128xbf16>,
    %12 = vector.extract_strided_slice %6 {offsets = [0, 128], sizes = [128, 256], strides = [1, 1]} : vector<128x384xf32> to vector<128x256xf32>
    %13 = arith.truncf %12 : vector<128x256xf32> to vector<128x256xbf16>
    %c0_9 = arith.constant 0 : index
    %c0_10 = arith.constant 0 : index
    %c0_11 = arith.constant 0 : index
    %14 = vector.load %arg6[%c0_9, %c0_10, %c0_11] : memref<1x128x256xbf16, #tpu.memory_space<vmem>>, vector<1x128x256xbf16>
    %15 = vector.shape_cast %14 : vector<1x128x256xbf16> to vector<128x256xbf16>
    %16 = vector.shape_cast %13 : vector<128x256xbf16> to vector<1x128x256xbf16>
    tpu.vector_store %arg6[%c0_9, %c0_10, %c0_11], %16 {strides = array<i32>} : memref<1x128x256xbf16, #tpu.memory_space<vmem>>, vector<1x128x256xbf16>,
    return
  }
  func.func @transform_0(%arg0: i32, %arg1: i32) -> (i32, i32, i32) {
    %c0_i32 = arith.constant 0 : i32
    %c0_i32_0 = arith.constant 0 : i32
    return %arg0, %arg1, %c0_i32 : i32, i32, i32
  }
  func.func @transform_1(%arg0: i32, %arg1: i32) -> (i32, i32) {
    %c0_i32 = arith.constant 0 : i32
    %c0_i32_0 = arith.constant 0 : i32
    %c0_i32_1 = arith.constant 0 : i32
    return %c0_i32, %c0_i32_0 : i32, i32
  }
  func.func @transform_2(%arg0: i32, %arg1: i32) -> (i32, i32) {
    %c0_i32 = arith.constant 0 : i32
    %c0_i32_0 = arith.constant 0 : i32
    %c0_i32_1 = arith.constant 0 : i32
    return %c0_i32, %c0_i32_0 : i32, i32
  }
  func.func @transform_3(%arg0: i32, %arg1: i32) -> (i32, i32, i32) {
    %c0_i32 = arith.constant 0 : i32
    %c0_i32_0 = arith.constant 0 : i32
    return %arg0, %arg1, %c0_i32 : i32, i32, i32
  }
  func.func @transform_4(%arg0: i32, %arg1: i32) -> (i32, i32, i32) {
    %c0_i32 = arith.constant 0 : i32
    %c0_i32_0 = arith.constant 0 : i32
    return %arg0, %arg1, %c0_i32 : i32, i32, i32
  }
}

module attributes {stable_mosaic.version = 11 : i64} {
  func.func @_flash_kernel(%arg0: i32, %arg1: i32, %arg2: i32, %arg3: memref<1x128x128xf32, #tpu.memory_space<vmem>>, %arg4: memref<1x128x128xbf16, #tpu.memory_space<vmem>>, %arg5: memref<1x128x256xbf16, #tpu.memory_space<vmem>>, %arg6: memref<128x128xbf16, #tpu.memory_space<vmem>>, %arg7: memref<1x128xf32, #tpu.memory_space<vmem>>, %arg8: memref<1x128x128xf32, #tpu.memory_space<vmem>>, %arg9: memref<128x1xf32, #tpu.memory_space<vmem>>, %arg10: memref<128x1xf32, #tpu.memory_space<vmem>>, %arg11: memref<128x128xf32, #tpu.memory_space<vmem>>) attributes {dimension_semantics = [#tpu.dimension_semantics<parallel>, #tpu.dimension_semantics<parallel>, #tpu.dimension_semantics<arbitrary>], iteration_bounds = array<i64: 2, 2, 2>, scalar_prefetch = 0 : i64, scratch_operands = 3 : i64, tpu.core_type = #tpu.core_type<tc>, window_params = [{transform_indices = @transform_0, window_bounds = array<i64: 1, 128, 128>}, {transform_indices = @transform_1, window_bounds = array<i64: 1, 128, 128>}, {transform_indices = @transform_2, window_bounds = array<i64: 1, 128, 256>}, {pipeline_mode = #tpu.pipeline_mode<synchronous>, transform_indices = @transform_3, window_bounds = array<i64: 128, 128>}, {pipeline_mode = #tpu.pipeline_mode<synchronous>, transform_indices = @transform_4, window_bounds = array<i64: 1, 128>}, {transform_indices = @transform_5, window_bounds = array<i64: 1, 128, 128>}]} {
    %c0_i32 = arith.constant 0 : i32
    %0 = arith.cmpi eq, %arg2, %c0_i32 : i32
    %1 = arith.extui %0 : i1 to i32
    %c0_i32_0 = arith.constant 0 : i32
    %2 = arith.cmpi ne, %1, %c0_i32_0 : i32
    scf.if %2 {
      %cst_24 = arith.constant 0xFF800000 : f32
      %37 = vector.broadcast %cst_24 : f32 to vector<128x1xf32>
      %c0_25 = arith.constant 0 : index
      %c0_26 = arith.constant 0 : index
      %38 = vector.load %arg9[%c0_25, %c0_26] : memref<128x1xf32, #tpu.memory_space<vmem>>, vector<128x1xf32>
      tpu.vector_store %arg9[%c0_25, %c0_26], %37 {strides = array<i32>} : memref<128x1xf32, #tpu.memory_space<vmem>>, vector<128x1xf32>,
      %cst_27 = arith.constant 0.000000e+00 : f32
      %39 = vector.broadcast %cst_27 : f32 to vector<128x1xf32>
      %c0_28 = arith.constant 0 : index
      %c0_29 = arith.constant 0 : index
      %40 = vector.load %arg10[%c0_28, %c0_29] : memref<128x1xf32, #tpu.memory_space<vmem>>, vector<128x1xf32>
      tpu.vector_store %arg10[%c0_28, %c0_29], %39 {strides = array<i32>} : memref<128x1xf32, #tpu.memory_space<vmem>>, vector<128x1xf32>,
      %cst_30 = arith.constant 0.000000e+00 : f32
      %41 = vector.broadcast %cst_30 : f32 to vector<128x128xf32>
      %c0_31 = arith.constant 0 : index
      %c0_32 = arith.constant 0 : index
      %42 = vector.load %arg11[%c0_31, %c0_32] : memref<128x128xf32, #tpu.memory_space<vmem>>, vector<128x128xf32>
      tpu.vector_store %arg11[%c0_31, %c0_32], %41 {strides = array<i32>} : memref<128x128xf32, #tpu.memory_space<vmem>>, vector<128x128xf32>,
    } else {
    }
    %c0 = arith.constant 0 : index
    %c0_1 = arith.constant 0 : index
    %c0_2 = arith.constant 0 : index
    %3 = vector.load %arg5[%c0, %c0_1, %c0_2] : memref<1x128x256xbf16, #tpu.memory_space<vmem>>, vector<1x128x256xbf16>
    %4 = vector.shape_cast %3 : vector<1x128x256xbf16> to vector<128x256xbf16>
    %5 = vector.extract_strided_slice %4 {offsets = [0, 0], sizes = [128, 128], strides = [1, 1]} : vector<128x256xbf16> to vector<128x128xbf16>
    %6 = vector.extract_strided_slice %4 {offsets = [0, 128], sizes = [128, 128], strides = [1, 1]} : vector<128x256xbf16> to vector<128x128xbf16>
    %c0_3 = arith.constant 0 : index
    %c0_4 = arith.constant 0 : index
    %c0_5 = arith.constant 0 : index
    %7 = vector.load %arg4[%c0_3, %c0_4, %c0_5] : memref<1x128x128xbf16, #tpu.memory_space<vmem>>, vector<1x128x128xbf16>
    %8 = vector.shape_cast %7 : vector<1x128x128xbf16> to vector<128x128xbf16>
    %cst = arith.constant dense<0.000000e+00> : vector<128x128xf32>
    %9 = tpu.matmul %8, %5, %cst {dimension_numbers = #tpu.dot_dimension_numbers<[1], [1], [0], [0], [0, 0, 1, 0], [], []>} : vector<128x128xbf16>, vector<128x128xbf16>, vector<128x128xf32> -> vector<128x128xf32>
    %c0_6 = arith.constant 0 : index
    %c0_7 = arith.constant 0 : index
    %10 = vector.load %arg9[%c0_6, %c0_7] : memref<128x1xf32, #tpu.memory_space<vmem>>, vector<128x1xf32>
    %cst_8 = arith.constant dense<0xFF800000> : vector<128xf32>
    %11 = vector.multi_reduction <maximumf>, %9, %cst_8 [1] : vector<128x128xf32> to vector<128xf32>
    %12 = vector.shape_cast %11 : vector<128xf32> to vector<128x1xf32>
    %13 = arith.maximumf %10, %12 : vector<128x1xf32>
    %c0_9 = arith.constant 0 : index
    %c0_10 = arith.constant 0 : index
    %14 = vector.load %arg9[%c0_9, %c0_10] : memref<128x1xf32, #tpu.memory_space<vmem>>, vector<128x1xf32>
    %15 = arith.subf %14, %13 : vector<128x1xf32>
    %16 = math.exp %15 : vector<128x1xf32>
    %17 = vector.broadcast %13 : vector<128x1xf32> to vector<128x128xf32>
    %18 = arith.subf %9, %17 : vector<128x128xf32>
    %19 = math.exp %18 : vector<128x128xf32>
    %c0_11 = arith.constant 0 : index
    %c0_12 = arith.constant 0 : index
    %20 = vector.load %arg10[%c0_11, %c0_12] : memref<128x1xf32, #tpu.memory_space<vmem>>, vector<128x1xf32>
    %21 = arith.mulf %16, %20 : vector<128x1xf32>
    %cst_13 = arith.constant dense<0.000000e+00> : vector<128xf32>
    %22 = vector.multi_reduction <add>, %19, %cst_13 [1] : vector<128x128xf32> to vector<128xf32>
    %23 = vector.shape_cast %22 : vector<128xf32> to vector<128x1xf32>
    %24 = arith.addf %21, %23 : vector<128x1xf32>
    %c0_14 = arith.constant 0 : index
    %c0_15 = arith.constant 0 : index
    %25 = vector.load %arg10[%c0_14, %c0_15] : memref<128x1xf32, #tpu.memory_space<vmem>>, vector<128x1xf32>
    tpu.vector_store %arg10[%c0_14, %c0_15], %24 {strides = array<i32>} : memref<128x1xf32, #tpu.memory_space<vmem>>, vector<128x1xf32>,
    %c0_16 = arith.constant 0 : index
    %c0_17 = arith.constant 0 : index
    %26 = vector.load %arg11[%c0_16, %c0_17] : memref<128x128xf32, #tpu.memory_space<vmem>>, vector<128x128xf32>
    %27 = vector.broadcast %16 : vector<128x1xf32> to vector<128x128xf32>
    %28 = arith.mulf %27, %26 : vector<128x128xf32>
    %29 = arith.truncf %19 : vector<128x128xf32> to vector<128x128xbf16>
    %cst_18 = arith.constant dense<0.000000e+00> : vector<128x128xf32>
    %30 = tpu.matmul %29, %6, %cst_18 {dimension_numbers = #tpu.dot_dimension_numbers<[1], [0], [0], [1], [0, 0, 1, 1], [], []>} : vector<128x128xbf16>, vector<128x128xbf16>, vector<128x128xf32> -> vector<128x128xf32>
    %31 = arith.addf %28, %30 : vector<128x128xf32>
    %c0_19 = arith.constant 0 : index
    %c0_20 = arith.constant 0 : index
    %32 = vector.load %arg11[%c0_19, %c0_20] : memref<128x128xf32, #tpu.memory_space<vmem>>, vector<128x128xf32>
    tpu.vector_store %arg11[%c0_19, %c0_20], %31 {strides = array<i32>} : memref<128x128xf32, #tpu.memory_space<vmem>>, vector<128x128xf32>,
    %c0_21 = arith.constant 0 : index
    %c0_22 = arith.constant 0 : index
    %33 = vector.load %arg9[%c0_21, %c0_22] : memref<128x1xf32, #tpu.memory_space<vmem>>, vector<128x1xf32>
    tpu.vector_store %arg9[%c0_21, %c0_22], %13 {strides = array<i32>} : memref<128x1xf32, #tpu.memory_space<vmem>>, vector<128x1xf32>,
    %c1_i32 = arith.constant 1 : i32
    %34 = arith.cmpi eq, %arg2, %c1_i32 : i32
    %35 = arith.extui %34 : i1 to i32
    %c0_i32_23 = arith.constant 0 : i32
    %36 = arith.cmpi ne, %35, %c0_i32_23 : i32
    scf.if %36 {
      %c0_24 = arith.constant 0 : index
      %c0_25 = arith.constant 0 : index
      %37 = vector.load %arg11[%c0_24, %c0_25] : memref<128x128xf32, #tpu.memory_space<vmem>>, vector<128x128xf32>
      %c0_26 = arith.constant 0 : index
      %c0_27 = arith.constant 0 : index
      %38 = vector.load %arg10[%c0_26, %c0_27] : memref<128x1xf32, #tpu.memory_space<vmem>>, vector<128x1xf32>
      %39 = tpu.reciprocal %38 {approx = true} : vector<128x1xf32> -> vector<128x1xf32>
      %40 = vector.broadcast %39 : vector<128x1xf32> to vector<128x128xf32>
      %41 = arith.mulf %37, %40 : vector<128x128xf32>
      %42 = arith.truncf %41 : vector<128x128xf32> to vector<128x128xbf16>
      %c0_28 = arith.constant 0 : index
      %c0_29 = arith.constant 0 : index
      %43 = vector.load %arg6[%c0_28, %c0_29] : memref<128x128xbf16, #tpu.memory_space<vmem>>, vector<128x128xbf16>
      %cst_30 = arith.constant dense<0.000000e+00> : vector<128x128xf32>
      %44 = tpu.matmul %42, %43, %cst_30 {dimension_numbers = #tpu.dot_dimension_numbers<[1], [0], [0], [1], [0, 0, 1, 1], [], []>} : vector<128x128xbf16>, vector<128x128xbf16>, vector<128x128xf32> -> vector<128x128xf32>
      %c0_31 = arith.constant 0 : index
      %c0_32 = arith.constant 0 : index
      %45 = vector.load %arg7[%c0_31, %c0_32] : memref<1x128xf32, #tpu.memory_space<vmem>>, vector<1x128xf32>
      %46 = vector.broadcast %45 : vector<1x128xf32> to vector<128x128xf32>
      %47 = arith.addf %44, %46 : vector<128x128xf32>
      %c0_33 = arith.constant 0 : index
      %c0_34 = arith.constant 0 : index
      %c0_35 = arith.constant 0 : index
      %48 = vector.load %arg3[%c0_33, %c0_34, %c0_35] : memref<1x128x128xf32, #tpu.memory_space<vmem>>, vector<1x128x128xf32>
      %49 = vector.shape_cast %48 : vector<1x128x128xf32> to vector<128x128xf32>
      %50 = arith.addf %47, %49 : vector<128x128xf32>
      %c0_36 = arith.constant 0 : index
      %c0_37 = arith.constant 0 : index
      %c0_38 = arith.constant 0 : index
      %51 = vector.load %arg8[%c0_36, %c0_37, %c0_38] : memref<1x128x128xf32, #tpu.memory_space<vmem>>, vector<1x128x128xf32>
      %52 = vector.shape_cast %51 : vector<1x128x128xf32> to vector<128x128xf32>
      %53 = vector.shape_cast %50 : vector<128x128xf32> to vector<1x128x128xf32>
      tpu.vector_store %arg8[%c0_36, %c0_37, %c0_38], %53 {strides = array<i32>} : memref<1x128x128xf32, #tpu.memory_space<vmem>>, vector<1x128x128xf32>,
    } else {
    }
    return
  }
  func.func @transform_0(%arg0: i32, %arg1: i32, %arg2: i32) -> (i32, i32, i32) {
    %c0_i32 = arith.constant 0 : i32
    %c0_i32_0 = arith.constant 0 : i32
    return %arg0, %arg1, %c0_i32 : i32, i32, i32
  }
  func.func @transform_1(%arg0: i32, %arg1: i32, %arg2: i32) -> (i32, i32, i32) {
    %c0_i32 = arith.constant 0 : i32
    %c0_i32_0 = arith.constant 0 : i32
    return %arg0, %arg1, %c0_i32 : i32, i32, i32
  }
  func.func @transform_2(%arg0: i32, %arg1: i32, %arg2: i32) -> (i32, i32, i32) {
    %c0_i32 = arith.constant 0 : i32
    %c0_i32_0 = arith.constant 0 : i32
    return %arg0, %arg2, %c0_i32 : i32, i32, i32
  }
  func.func @transform_3(%arg0: i32, %arg1: i32, %arg2: i32) -> (i32, i32) {
    %c0_i32 = arith.constant 0 : i32
    %c0_i32_0 = arith.constant 0 : i32
    %c0_i32_1 = arith.constant 0 : i32
    return %c0_i32, %c0_i32_0 : i32, i32
  }
  func.func @transform_4(%arg0: i32, %arg1: i32, %arg2: i32) -> (i32, i32) {
    %c0_i32 = arith.constant 0 : i32
    %c0_i32_0 = arith.constant 0 : i32
    %c0_i32_1 = arith.constant 0 : i32
    return %c0_i32, %c0_i32_0 : i32, i32
  }
  func.func @transform_5(%arg0: i32, %arg1: i32, %arg2: i32) -> (i32, i32, i32) {
    %c0_i32 = arith.constant 0 : i32
    %c0_i32_0 = arith.constant 0 : i32
    return %arg0, %arg1, %c0_i32 : i32, i32, i32
  }
}

</mosaic_0001>

<llo_original>
// kernel: nonlocal_block.2
$region0: #{nonlocal_block.2}
  #allocation0 [shape = 'u32[]', space=smem, size = 0x4, offset = 0x4, fixed_abs, tag = 'smem constant byte address 0x4 - core index']
  #allocation1 [shape = 'u32[144,128]{1,0:T(1,128)}', space=vmem, size = 0x12000, scoped, tag = 'internal scratch']
  %s0 = inlined_call_operand.vmem [shape: bf16[2,256,128], index: 0, kind: input, shape index: {}]
  %s1 = inlined_call_operand.vmem [shape: bf16[128,384], index: 1, kind: input, shape index: {}]
  %s2 = inlined_call_operand.vmem [shape: f32[1,384], index: 2, kind: input, shape index: {}]
  %s3 = inlined_call_operand.vmem [shape: bf16[2,256,128], index: 3, kind: output, shape index: {0}]
  %s4 = inlined_call_operand.vmem [shape: bf16[2,256,256], index: 4, kind: output, shape index: {1}]
  %5 = xla_tuple %s3, %s4
  %s6 = sld [smem:[#allocation0]]
  $region53: #{nonlocal_block.2} parent=0
    _
  %s8 = ssub.s32 1, %s6
  %s9 = scalar_select 0, %s8, %s6
  loop: start=0, step=1, limit=6
  $region2: #{nonlocal_block.2} parent=0 // loop_pre_header
    _
  $region3: #{nonlocal_block.2} parent=0 // loop_header
    %s11 = sphi 0, %s15
    %p12 = scmp.ge.s32.totalorder %s11, 6
    %s18 = sphi 0, %s30
    %s19 = sphi 0, %s26
    %s20 = sphi 0, %s18
    %s21 = sphi 0, %s19
    %s22 = sphi 0, %s20
    %s23 = sphi 0, %s21
    %s35 = sphi 0, %s37
    %s38 = sphi 0, %s35
    %s39 = sphi 0, %s38
    %s55 = sphi 0, %s39
    %s59 = sphi 0, %s59
    %s61 = sphi 0, %s59
    %s62 = sphi 0, %s61
    %s76 = sphi 0, %s62
    %s80 = sphi 0, %s80
    %s82 = sphi 0, %s80
    %s83 = sphi 0, %s82
    %s97 = sphi 0, %s83
    %s105 = sphi 0, %s107
    %s108 = sphi 0, %s105
    %s109 = sphi 0, %s108
    %s125 = sphi 0, %s109
    %s133 = sphi 0, %s135
    %s136 = sphi 0, %s133
    %s137 = sphi 0, %s136
    %s153 = sphi 0, %s137
  $region4: #{nonlocal_block.2} parent=0 // loop_header_branch
    %14 = sbr.rel (%p12) target = $region8
  $region5: #{nonlocal_block.2} parent=0 // loop_body
    %s16 = ssub.s32 %s11, 1
    %s17 = ssub.s32 %s11, 2
    %s24 = sadd.s32 1, %s19
    %p25 = scmp.ge.s32.totalorder %s24, 2
    %s26 = scalar_select %p25, 0, %s24
    %s27 = sadd.s32 1, %s18
    %s28 = scalar_select %p25, %s27, %s18
    %p29 = scmp.ge.s32.totalorder %s28, 2
    %s30 = scalar_select %p29, 0, %s28
    %s31 = ssub.s32 %s18, %s30
    %s32 = ssub.s32 %s19, %s26
    %s33 = sor.u32 %s31, %s32
    %p34 = scmp.eq.s32.totalorder %s33, 0
    %s36 = sadd.s32 %s35, 1
    %s37 = scalar_select %p34, %s35, %s36
    %p40 = pneg %p34
    %p41 = scmp.eq.s32.totalorder %s11, 3
    %p42 = por %p40, %p41
    %p43 = scmp.ne.s32.totalorder %s35, %s38
    %p44 = scmp.eq.s32.totalorder %s11, 0
    %p45 = por %p43, %p44
    %p46 = scmp.ne.s32.totalorder %s35, %s38
    %p47 = scmp.eq.s32.totalorder %s16, 3
    %p48 = por %p46, %p47
    %p49 = scmp.ne.s32.totalorder %s38, %s39
    %p50 = scmp.eq.s32.totalorder %s16, 0
    %p51 = por %p49, %p50
    %p52 = scmp.ne.s32.totalorder %s38, %s39
    %p53 = scmp.eq.s32.totalorder %s17, 3
    %p54 = por %p52, %p53
    %p56 = scmp.ne.s32.totalorder %s39, %s55
    %p57 = scmp.eq.s32.totalorder %s17, 0
    %p58 = por %p56, %p57
    %s60 = sadd.s32 %s59, 1
    %p63 = scmp.eq.s32.totalorder %s11, 3
    %p64 = scmp.ne.s32.totalorder %s59, %s61
    %p65 = scmp.eq.s32.totalorder %s11, 0
    %p66 = por %p64, %p65
    %p67 = scmp.ne.s32.totalorder %s59, %s61
    %p68 = scmp.eq.s32.totalorder %s16, 3
    %p69 = por %p67, %p68
    %p70 = scmp.ne.s32.totalorder %s61, %s62
    %p71 = scmp.eq.s32.totalorder %s16, 0
    %p72 = por %p70, %p71
    %p73 = scmp.ne.s32.totalorder %s61, %s62
    %p74 = scmp.eq.s32.totalorder %s17, 3
    %p75 = por %p73, %p74
    %p77 = scmp.ne.s32.totalorder %s62, %s76
    %p78 = scmp.eq.s32.totalorder %s17, 0
    %p79 = por %p77, %p78
    %s81 = sadd.s32 %s80, 1
    %p84 = scmp.eq.s32.totalorder %s11, 3
    %p85 = scmp.ne.s32.totalorder %s80, %s82
    %p86 = scmp.eq.s32.totalorder %s11, 0
    %p87 = por %p85, %p86
    %p88 = scmp.ne.s32.totalorder %s80, %s82
    %p89 = scmp.eq.s32.totalorder %s16, 3
    %p90 = por %p88, %p89
    %p91 = scmp.ne.s32.totalorder %s82, %s83
    %p92 = scmp.eq.s32.totalorder %s16, 0
    %p93 = por %p91, %p92
    %p94 = scmp.ne.s32.totalorder %s82, %s83
    %p95 = scmp.eq.s32.totalorder %s17, 3
    %p96 = por %p94, %p95
    %p98 = scmp.ne.s32.totalorder %s83, %s97
    %p99 = scmp.eq.s32.totalorder %s17, 0
    %p100 = por %p98, %p99
    %s101 = ssub.s32 %s18, %s30
    %s102 = ssub.s32 %s19, %s26
    %s103 = sor.u32 %s101, %s102
    %p104 = scmp.eq.s32.totalorder %s103, 0
    %s106 = sadd.s32 %s105, 1
    %s107 = scalar_select %p104, %s105, %s106
    %p110 = pneg %p104
    %p111 = scmp.eq.s32.totalorder %s11, 3
    %p112 = por %p110, %p111
    %p113 = scmp.ne.s32.totalorder %s105, %s108
    %p114 = scmp.eq.s32.totalorder %s11, 0
    %p115 = por %p113, %p114
    %p116 = scmp.ne.s32.totalorder %s105, %s108
    %p117 = scmp.eq.s32.totalorder %s16, 3
    %p118 = por %p116, %p117
    %p119 = scmp.ne.s32.totalorder %s108, %s109
    %p120 = scmp.eq.s32.totalorder %s16, 0
    %p121 = por %p119, %p120
    %p122 = scmp.ne.s32.totalorder %s108, %s109
    %p123 = scmp.eq.s32.totalorder %s17, 3
    %p124 = por %p122, %p123
    %p126 = scmp.ne.s32.totalorder %s109, %s125
    %p127 = scmp.eq.s32.totalorder %s17, 0
    %p128 = por %p126, %p127
    %s129 = ssub.s32 %s18, %s30
    %s130 = ssub.s32 %s19, %s26
    %s131 = sor.u32 %s129, %s130
    %p132 = scmp.eq.s32.totalorder %s131, 0
    %s134 = sadd.s32 %s133, 1
    %s135 = scalar_select %p132, %s133, %s134
    %p138 = pneg %p132
    %p139 = scmp.eq.s32.totalorder %s11, 3
    %p140 = por %p138, %p139
    %p141 = scmp.ne.s32.totalorder %s133, %s136
    %p142 = scmp.eq.s32.totalorder %s11, 0
    %p143 = por %p141, %p142
    %p144 = scmp.ne.s32.totalorder %s133, %s136
    %p145 = scmp.eq.s32.totalorder %s16, 3
    %p146 = por %p144, %p145
    %p147 = scmp.ne.s32.totalorder %s136, %s137
    %p148 = scmp.eq.s32.totalorder %s16, 0
    %p149 = por %p147, %p148
    %p150 = scmp.ne.s32.totalorder %s136, %s137
    %p151 = scmp.eq.s32.totalorder %s17, 3
    %p152 = por %p150, %p151
    %p154 = scmp.ne.s32.totalorder %s137, %s153
    %p155 = scmp.eq.s32.totalorder %s17, 0
    %p156 = por %p154, %p155
    %p157 = scmp.le.s32.totalorder 1, %s11
    %p158 = scmp.lt.s32.totalorder %s11, 5
    %p159 = pnand %p157, %p158
    %p160 = pneg %p159
    // Predicated region
    $region9: #{nonlocal_block.2} parent=5 // pred_check
      _
    $region10: #{nonlocal_block.2} parent=5 // pred_check_branch
      %162 = sbr.rel (%p159) target = $region12
    $region11: #{nonlocal_block.2} parent=5 // pred_region
      %s163 = ssub.s32 %s11, 1
      // Predicated region
      $region13: #{nonlocal_block.2} parent=11 // pred_check
        %p164 = pneg %p72
      $region14: #{nonlocal_block.2} parent=11 // pred_check_branch
        %166 = sbr.rel (%p164) target = $region16
      $region15: #{nonlocal_block.2} parent=11 // pred_region
        _
      $region16: #{nonlocal_block.2} parent=11 // pred_fallthru
        _
      // Predicated region
      $region17: #{nonlocal_block.2} parent=11 // pred_check
        %p167 = pneg %p93
      $region18: #{nonlocal_block.2} parent=11 // pred_check_branch
        %169 = sbr.rel (%p167) target = $region20
      $region19: #{nonlocal_block.2} parent=11 // pred_region
        _
      $region20: #{nonlocal_block.2} parent=11 // pred_fallthru
        _
    $region12: #{nonlocal_block.2} parent=5 // pred_fallthru
      _
    %p170 = scmp.lt.s32.totalorder %s11, 4
    // Predicated region
    $region21: #{nonlocal_block.2} parent=5 // pred_check
      %p171 = pneg %p170
    $region22: #{nonlocal_block.2} parent=5 // pred_check_branch
      %173 = sbr.rel (%p171) target = $region24
    $region23: #{nonlocal_block.2} parent=5 // pred_region
      // Predicated region
      $region25: #{nonlocal_block.2} parent=23 // pred_check
        %p174 = pneg %p45
      $region26: #{nonlocal_block.2} parent=23 // pred_check_branch
        %176 = sbr.rel (%p174) target = $region28
      $region27: #{nonlocal_block.2} parent=23 // pred_region
        %s177 = smul.u32 16, %s19
        %p178 = scmp.lt.s32.totalorder %s18, 1
        %s179 = scalar_select %p178, %s18, 1
        %p180 = scmp.lt.s32.totalorder %s177, 31
        %s181 = scalar_select %p180, %s177, 31
        %s182 = smul.addr %s179, 32
        %s183 = sadd.s32 %s181, %s182
        %s184 = smul.addr %s183, 4
        %s185 = scalar_lea.vmem %s0, %s184
        %s186 = smul.u32 16, %s19
      $region28: #{nonlocal_block.2} parent=23 // pred_fallthru
        _
    $region24: #{nonlocal_block.2} parent=5 // pred_fallthru
      _
    %p187 = scmp.le.s32.totalorder 1, %s11
    %p188 = scmp.lt.s32.totalorder %s11, 5
    %p189 = pnand %p187, %p188
    %p190 = pneg %p189
    // Predicated region
    $region29: #{nonlocal_block.2} parent=5 // pred_check
      _
    $region30: #{nonlocal_block.2} parent=5 // pred_check_branch
      %192 = sbr.rel (%p189) target = $region32
    $region31: #{nonlocal_block.2} parent=5 // pred_region
      %s193 = ssub.s32 %s11, 1
      %s194 = smul.u32 16, %s21
      %p195 = scmp.lt.s32.totalorder %s20, 1
      %s196 = scalar_select %p195, %s20, 1
      %p197 = scmp.lt.s32.totalorder %s194, 31
      %s198 = scalar_select %p197, %s194, 31
      %s199 = smul.addr %s196, 32
      %s200 = sadd.s32 %s198, %s199
      %s201 = smul.addr %s200, 4
      %s202 = scalar_lea.vmem %s0, %s201
      %p203 = pneg %p51
      %p204 = pneg %p48
      %p205 = pneg %p72
      %p206 = pneg %p69
      %p207 = pneg %p93
      %p208 = pneg %p90
      %p209 = pneg %p121
      %p210 = pneg %p118
      %s211 = smul.u32 16, %s21
      %p212 = scmp.lt.s32.totalorder %s20, 1
      %s213 = scalar_select %p212, %s20, 1
      %p214 = scmp.lt.s32.totalorder %s211, 31
      %s215 = scalar_select %p214, %s211, 31
      %s216 = smul.addr %s213, 32
      %s217 = sadd.s32 %s215, %s216
      %s218 = smul.addr %s217, 4
      %s219 = scalar_lea.vmem %s3, %s218
      %p220 = pneg %p149
      %p221 = pneg %p146
      %s222 = smul.u32 16, %s21
      %p223 = scmp.lt.s32.totalorder %s20, 1
      %s224 = scalar_select %p223, %s20, 1
      %p225 = scmp.lt.s32.totalorder %s222, 31
      %s226 = scalar_select %p225, %s222, 31
      %s227 = smul.addr %s226, 2
      %s228 = smul.addr %s224, 64
      %s229 = sadd.s32 %s227, %s228
      %s230 = smul.addr %s229, 4
      %s231 = scalar_lea.vmem %s4, %s230
      %s232 = smul.u32 16, %s21
      %p233 = scmp.lt.s32.totalorder %s20, 1
      %s234 = scalar_select %p233, %s20, 1
      %p235 = scmp.lt.s32.totalorder %s232, 31
      %s236 = scalar_select %p235, %s232, 31
      %s237 = smul.addr %s234, 32
      %s238 = sadd.s32 %s236, %s237
      %s239 = smul.addr %s238, 4
      %s240 = scalar_lea.vmem %s0, %s239
      %s241 = smul.u32 16, %s21
      %s242 = smul.u32 16, %s21
      %p243 = scmp.lt.s32.totalorder %s20, 1
      %s244 = scalar_select %p243, %s20, 1
      %p245 = scmp.lt.s32.totalorder %s242, 31
      %s246 = scalar_select %p245, %s242, 31
      %s247 = smul.addr %s244, 32
      %s248 = sadd.s32 %s246, %s247
      %s249 = smul.addr %s248, 4
      %s250 = scalar_lea.vmem %s3, %s249
      %s251 = smul.u32 16, %s21
      %s252 = smul.u32 16, %s21
      %p253 = scmp.lt.s32.totalorder %s20, 1
      %s254 = scalar_select %p253, %s20, 1
      %p255 = scmp.lt.s32.totalorder %s252, 31
      %s256 = scalar_select %p255, %s252, 31
      %s257 = smul.addr %s256, 2
      %s258 = smul.addr %s254, 64
      %s259 = sadd.s32 %s257, %s258
      %s260 = smul.addr %s259, 4
      %s261 = scalar_lea.vmem %s4, %s260
      %s262 = smul.u32 16, %s21
      %v264 = vld [vmem:[%s240] sm:$0xf]
      %v265 = vld [vmem:[%s240 + $0x4] sm:$0xf]
      %v266 = vld [vmem:[%s240 + $0x8] sm:$0xf]
      %v267 = vld [vmem:[%s240 + $0xc] sm:$0xf]
      %v268 = vld [vmem:[%s240 + $0x10] sm:$0xf]
      %v269 = vld [vmem:[%s240 + $0x14] sm:$0xf]
      %v270 = vld [vmem:[%s240 + $0x18] sm:$0xf]
      %v271 = vld [vmem:[%s240 + $0x1c] sm:$0xf]
      %v272 = vld [vmem:[%s240 + $0x20] sm:$0xf]
      %v273 = vld [vmem:[%s240 + $0x24] sm:$0xf]
      %v274 = vld [vmem:[%s240 + $0x28] sm:$0xf]
      %v275 = vld [vmem:[%s240 + $0x2c] sm:$0xf]
      %v276 = vld [vmem:[%s240 + $0x30] sm:$0xf]
      %v277 = vld [vmem:[%s240 + $0x34] sm:$0xf]
      %v278 = vld [vmem:[%s240 + $0x38] sm:$0xf]
      %v279 = vld [vmem:[%s240 + $0x3c] sm:$0xf]
      %v280 = vld [vmem:[%s1] sm:$0xff]
      %v281 = vld [vmem:[%s1 + $0x8] sm:$0xf]
      %v282 = vld [vmem:[%s1 + $0xc] sm:$0xff]
      %v283 = vld [vmem:[%s1 + $0x14] sm:$0xf]
      %v284 = vld [vmem:[%s1 + $0x18] sm:$0xff]
      %v285 = vld [vmem:[%s1 + $0x20] sm:$0xf]
      %v286 = vld [vmem:[%s1 + $0x24] sm:$0xff]
      %v287 = vld [vmem:[%s1 + $0x2c] sm:$0xf]
      %v288 = vld [vmem:[%s1 + $0x30] sm:$0xff]
      %v289 = vld [vmem:[%s1 + $0x38] sm:$0xf]
      %v290 = vld [vmem:[%s1 + $0x3c] sm:$0xff]
      %v291 = vld [vmem:[%s1 + $0x44] sm:$0xf]
      %v292 = vld [vmem:[%s1 + $0x48] sm:$0xff]
      %v293 = vld [vmem:[%s1 + $0x50] sm:$0xf]
      %v294 = vld [vmem:[%s1 + $0x54] sm:$0xff]
      %v295 = vld [vmem:[%s1 + $0x5c] sm:$0xf]
      %v296 = vld [vmem:[%s1 + $0x60] sm:$0xff]
      %v297 = vld [vmem:[%s1 + $0x68] sm:$0xf]
      %v298 = vld [vmem:[%s1 + $0x6c] sm:$0xff]
      %v299 = vld [vmem:[%s1 + $0x74] sm:$0xf]
      %v300 = vld [vmem:[%s1 + $0x78] sm:$0xff]
      %v301 = vld [vmem:[%s1 + $0x80] sm:$0xf]
      %v302 = vld [vmem:[%s1 + $0x84] sm:$0xff]
      %v303 = vld [vmem:[%s1 + $0x8c] sm:$0xf]
      %v304 = vld [vmem:[%s1 + $0x90] sm:$0xff]
      %v305 = vld [vmem:[%s1 + $0x98] sm:$0xf]
      %v306 = vld [vmem:[%s1 + $0x9c] sm:$0xff]
      %v307 = vld [vmem:[%s1 + $0xa4] sm:$0xf]
      %v308 = vld [vmem:[%s1 + $0xa8] sm:$0xff]
      %v309 = vld [vmem:[%s1 + $0xb0] sm:$0xf]
      %v310 = vld [vmem:[%s1 + $0xb4] sm:$0xff]
      %v311 = vld [vmem:[%s1 + $0xbc] sm:$0xf]
      %v312 = vld [vmem:[%s2] sm:$0x7]
      %v314 = vlaneseq
      %v315 = vshrl.u32 %v314, 7
      %v316 = vsub.s32 0, %v315
      %v317 = vrot.slane %v312, %v316
      %v318 = vlaneseq
      %v319 = vshrl.u32 %v318, 7
      %v320 = vsub.s32 1, %v319
      %v321 = vrot.slane %v312, %v320
      %v322 = vlaneseq
      %v323 = vshrl.u32 %v322, 7
      %v324 = vsub.s32 2, %v323
      %v325 = vrot.slane %v312, %v324
      %v345 = vunpack.c.l.b16 %v264
      %v346 = vunpack.c.l.b16 %v265
      %v347 = vunpack.c.l.b16 %v266
      %v348 = vunpack.c.l.b16 %v267
      %v349 = vunpack.c.l.b16 %v268
      %v350 = vunpack.c.l.b16 %v269
      %v351 = vunpack.c.l.b16 %v270
      %v352 = vunpack.c.l.b16 %v271
      %v353 = vunpack.c.l.b16 %v272
      %v354 = vunpack.c.l.b16 %v273
      %v355 = vunpack.c.l.b16 %v274
      %v356 = vunpack.c.l.b16 %v275
      %v357 = vunpack.c.l.b16 %v276
      %v358 = vunpack.c.l.b16 %v277
      %v359 = vunpack.c.l.b16 %v278
      %v360 = vunpack.c.l.b16 %v279
      %v361 = vpack.c.b16 %v346, %v345
      %v362 = vpack.c.b16 %v348, %v347
      %v363 = vpack.c.b16 %v350, %v349
      %v364 = vpack.c.b16 %v352, %v351
      %v365 = vpack.c.b16 %v354, %v353
      %v366 = vpack.c.b16 %v356, %v355
      %v367 = vpack.c.b16 %v358, %v357
      %v368 = vpack.c.b16 %v360, %v359
      %v409 = vunpack.c.l.b16 %v280
      %v410 = vunpack.c.h.b16 %v280
      %v411 = vunpack.c.l.b16 %v281
      %v412 = vunpack.c.l.b16 %v282
      %v413 = vunpack.c.h.b16 %v282
      %v414 = vunpack.c.l.b16 %v283
      %v415 = vunpack.c.l.b16 %v284
      %v416 = vunpack.c.h.b16 %v284
      %v417 = vunpack.c.l.b16 %v285
      %v418 = vunpack.c.l.b16 %v286
      %v419 = vunpack.c.h.b16 %v286
      %v420 = vunpack.c.l.b16 %v287
      %v421 = vunpack.c.l.b16 %v288
      %v422 = vunpack.c.h.b16 %v288
      %v423 = vunpack.c.l.b16 %v289
      %v424 = vunpack.c.l.b16 %v290
      %v425 = vunpack.c.h.b16 %v290
      %v426 = vunpack.c.l.b16 %v291
      %v427 = vunpack.c.l.b16 %v292
      %v428 = vunpack.c.h.b16 %v292
      %v429 = vunpack.c.l.b16 %v293
      %v430 = vunpack.c.l.b16 %v294
      %v431 = vunpack.c.h.b16 %v294
      %v432 = vunpack.c.l.b16 %v295
      %v433 = vunpack.c.l.b16 %v296
      %v434 = vunpack.c.h.b16 %v296
      %v435 = vunpack.c.l.b16 %v297
      %v436 = vunpack.c.l.b16 %v298
      %v437 = vunpack.c.h.b16 %v298
      %v438 = vunpack.c.l.b16 %v299
      %v439 = vunpack.c.l.b16 %v300
      %v440 = vunpack.c.h.b16 %v300
      %v441 = vunpack.c.l.b16 %v301
      %v442 = vunpack.c.l.b16 %v302
      %v443 = vunpack.c.h.b16 %v302
      %v444 = vunpack.c.l.b16 %v303
      %v445 = vunpack.c.l.b16 %v304
      %v446 = vunpack.c.h.b16 %v304
      %v447 = vunpack.c.l.b16 %v305
      %v448 = vunpack.c.l.b16 %v306
      %v449 = vunpack.c.h.b16 %v306
      %v450 = vunpack.c.l.b16 %v307
      %v451 = vunpack.c.l.b16 %v308
      %v452 = vunpack.c.h.b16 %v308
      %v453 = vunpack.c.l.b16 %v309
      %v454 = vunpack.c.l.b16 %v310
      %v455 = vunpack.c.h.b16 %v310
      %v456 = vunpack.c.l.b16 %v311
      %v457 = vpack.c.b16 %v412, %v409
      %v458 = vpack.c.b16 %v413, %v410
      %v459 = vpack.c.b16 %v414, %v411
      %v460 = vpack.c.b16 %v418, %v415
      %v461 = vpack.c.b16 %v419, %v416
      %v462 = vpack.c.b16 %v420, %v417
      %v463 = vpack.c.b16 %v424, %v421
      %v464 = vpack.c.b16 %v425, %v422
      %v465 = vpack.c.b16 %v426, %v423
      %v466 = vpack.c.b16 %v430, %v427
      %v467 = vpack.c.b16 %v431, %v428
      %v468 = vpack.c.b16 %v432, %v429
      %v469 = vpack.c.b16 %v436, %v433
      %v470 = vpack.c.b16 %v437, %v434
      %v471 = vpack.c.b16 %v438, %v435
      %v472 = vpack.c.b16 %v442, %v439
      %v473 = vpack.c.b16 %v443, %v440
      %v474 = vpack.c.b16 %v444, %v441
      %v475 = vpack.c.b16 %v448, %v445
      %v476 = vpack.c.b16 %v449, %v446
      %v477 = vpack.c.b16 %v450, %v447
      %v478 = vpack.c.b16 %v454, %v451
      %v479 = vpack.c.b16 %v455, %v452
      %v480 = vpack.c.b16 %v456, %v453
      %505 = vmatprep.subr.bf16.mxu0 %v458
      %506 = vmatpush1.bf16.msra.mxu0 %v457
      %507 = vmatprep.subr.bf16.mxu0 %v461
      %508 = vmatpush1.bf16.msra.mxu0 %v460
      %509 = vmatprep.subr.bf16.mxu0 %v464
      %510 = vmatpush1.bf16.msra.mxu0 %v463
      %511 = vmatprep.subr.bf16.mxu0 %v467
      %512 = vmatpush1.bf16.msra.mxu0 %v466
      %513 = vmatprep.subr.bf16.mxu0 %v470
      %514 = vmatpush1.bf16.msra.mxu0 %v469
      %515 = vmatprep.subr.bf16.mxu0 %v473
      %516 = vmatpush1.bf16.msra.mxu0 %v472
      %517 = vmatprep.subr.bf16.mxu0 %v476
      %518 = vmatpush1.bf16.msra.mxu0 %v475
      %519 = vmatprep.subr.bf16.mxu0 %v479
      %520 = vmatpush1.bf16.msra.mxu0 %v478
      %521 = vmatprep.subr.bf16.mxu0 0
      %522 = vmatpush1.bf16.msra.mxu0 0
      %523 = vmatprep.subr.bf16.mxu0 0
      %524 = vmatpush1.bf16.msra.mxu0 0
      %525 = vmatprep.subr.bf16.mxu0 0
      %526 = vmatpush1.bf16.msra.mxu0 0
      %527 = vmatprep.subr.bf16.mxu0 0
      %528 = vmatpush1.bf16.msra.mxu0 0
      %529 = vmatprep.subr.bf16.mxu0 0
      %530 = vmatpush1.bf16.msra.mxu0 0
      %531 = vmatprep.subr.bf16.mxu0 0
      %532 = vmatpush1.bf16.msra.mxu0 0
      %533 = vmatprep.subr.bf16.mxu0 0
      %534 = vmatpush1.bf16.msra.mxu0 0
      %535 = vmatprep.subr.bf16.mxu0 0
      %536 = vmatpush1.bf16.msra.mxu0 0
      %537 = vmatprep.mubr.bf16.mxu0 0
      %538 = vmatmul.mubr.bf16.gmra.mrb[0].mxu0 %v361
      %v539 = vpop.f32.mrb[0].mxu0
      %v540 = vadd.f32 %v317, %v539
      %v541 = vpop.f32.mrb[0].mxu0
      %v542 = vadd.f32 %v321, %v541
      %v543 = vpop.f32.mrb[0].mxu0
      %v544 = vadd.f32 %v317, %v543
      %v545 = vpop.f32.mrb[0].mxu0
      %v546 = vadd.f32 %v321, %v545
      %547 = vmatprep.mubr.bf16.mxu0 0
      %548 = vmatmul.mubr.bf16.gmra.mrb[0].mxu0 %v362
      %v549 = vpop.f32.mrb[0].mxu0
      %v550 = vadd.f32 %v317, %v549
      %v551 = vpop.f32.mrb[0].mxu0
      %v552 = vadd.f32 %v321, %v551
      %v553 = vpop.f32.mrb[0].mxu0
      %v554 = vadd.f32 %v317, %v553
      %v555 = vpop.f32.mrb[0].mxu0
      %v556 = vadd.f32 %v321, %v555
      %557 = vmatprep.mubr.bf16.mxu0 0
      %558 = vmatmul.mubr.bf16.gmra.mrb[0].mxu0 %v363
      %v559 = vpop.f32.mrb[0].mxu0
      %v560 = vadd.f32 %v317, %v559
      %v561 = vpop.f32.mrb[0].mxu0
      %v562 = vadd.f32 %v321, %v561
      %v563 = vpop.f32.mrb[0].mxu0
      %v564 = vadd.f32 %v317, %v563
      %v565 = vpop.f32.mrb[0].mxu0
      %v566 = vadd.f32 %v321, %v565
      %567 = vmatprep.mubr.bf16.mxu0 0
      %568 = vmatmul.mubr.bf16.gmra.mrb[0].mxu0 %v364
      %v569 = vpop.f32.mrb[0].mxu0
      %v570 = vadd.f32 %v317, %v569
      %v571 = vpop.f32.mrb[0].mxu0
      %v572 = vadd.f32 %v321, %v571
      %v573 = vpop.f32.mrb[0].mxu0
      %v574 = vadd.f32 %v317, %v573
      %v575 = vpop.f32.mrb[0].mxu0
      %v576 = vadd.f32 %v321, %v575
      %577 = vmatprep.mubr.bf16.mxu0 0
      %578 = vmatmul.mubr.bf16.gmra.mrb[0].mxu0 %v365
      %v579 = vpop.f32.mrb[0].mxu0
      %v580 = vadd.f32 %v317, %v579
      %v581 = vpop.f32.mrb[0].mxu0
      %v582 = vadd.f32 %v321, %v581
      %v583 = vpop.f32.mrb[0].mxu0
      %v584 = vadd.f32 %v317, %v583
      %v585 = vpop.f32.mrb[0].mxu0
      %v586 = vadd.f32 %v321, %v585
      %587 = vmatprep.mubr.bf16.mxu0 0
      %588 = vmatmul.mubr.bf16.gmra.mrb[0].mxu0 %v366
      %v589 = vpop.f32.mrb[0].mxu0
      %v590 = vadd.f32 %v317, %v589
      %v591 = vpop.f32.mrb[0].mxu0
      %v592 = vadd.f32 %v321, %v591
      %v593 = vpop.f32.mrb[0].mxu0
      %v594 = vadd.f32 %v317, %v593
      %v595 = vpop.f32.mrb[0].mxu0
      %v596 = vadd.f32 %v321, %v595
      %597 = vmatprep.mubr.bf16.mxu0 0
      %598 = vmatmul.mubr.bf16.gmra.mrb[0].mxu0 %v367
      %v599 = vpop.f32.mrb[0].mxu0
      %v600 = vadd.f32 %v317, %v599
      %v601 = vpop.f32.mrb[0].mxu0
      %v602 = vadd.f32 %v321, %v601
      %v603 = vpop.f32.mrb[0].mxu0
      %v604 = vadd.f32 %v317, %v603
      %v605 = vpop.f32.mrb[0].mxu0
      %v606 = vadd.f32 %v321, %v605
      %607 = vmatprep.mubr.bf16.mxu0 0
      %608 = vmatmul.mubr.bf16.gmra.mrb[0].mxu0 %v368
      %v609 = vpop.f32.mrb[0].mxu0
      %v610 = vadd.f32 %v317, %v609
      %v611 = vpop.f32.mrb[0].mxu0
      %v612 = vadd.f32 %v321, %v611
      %v613 = vpop.f32.mrb[0].mxu0
      %v614 = vadd.f32 %v317, %v613
      %v615 = vpop.f32.mrb[0].mxu0
      %v616 = vadd.f32 %v321, %v615
      %617 = vdwg.mxu0
      %618 = vmatprep.subr.bf16.mxu0 0
      %619 = vmatpush1.bf16.msra.mxu0 %v459
      %620 = vmatprep.subr.bf16.mxu0 0
      %621 = vmatpush1.bf16.msra.mxu0 %v462
      %622 = vmatprep.subr.bf16.mxu0 0
      %623 = vmatpush1.bf16.msra.mxu0 %v465
      %624 = vmatprep.subr.bf16.mxu0 0
      %625 = vmatpush1.bf16.msra.mxu0 %v468
      %626 = vmatprep.subr.bf16.mxu0 0
      %627 = vmatpush1.bf16.msra.mxu0 %v471
      %628 = vmatprep.subr.bf16.mxu0 0
      %629 = vmatpush1.bf16.msra.mxu0 %v474
      %630 = vmatprep.subr.bf16.mxu0 0
      %631 = vmatpush1.bf16.msra.mxu0 %v477
      %632 = vmatprep.subr.bf16.mxu0 0
      %633 = vmatpush1.bf16.msra.mxu0 %v480
      %634 = vmatprep.subr.bf16.mxu0 0
      %635 = vmatpush1.bf16.msra.mxu0 0
      %636 = vmatprep.subr.bf16.mxu0 0
      %637 = vmatpush1.bf16.msra.mxu0 0
      %638 = vmatprep.subr.bf16.mxu0 0
      %639 = vmatpush1.bf16.msra.mxu0 0
      %640 = vmatprep.subr.bf16.mxu0 0
      %641 = vmatpush1.bf16.msra.mxu0 0
      %642 = vmatprep.subr.bf16.mxu0 0
      %643 = vmatpush1.bf16.msra.mxu0 0
      %644 = vmatprep.subr.bf16.mxu0 0
      %645 = vmatpush1.bf16.msra.mxu0 0
      %646 = vmatprep.subr.bf16.mxu0 0
      %647 = vmatpush1.bf16.msra.mxu0 0
      %648 = vmatprep.subr.bf16.mxu0 0
      %649 = vmatpush1.bf16.msra.mxu0 0
      %650 = vmatprep.mubr.bf16.mxu0 0
      %651 = vmatmul.mubr.bf16.gmra.mrb[0].mxu0 %v361
      %v652 = vpop.f32.mrb[0].mxu0
      %v653 = vadd.f32 %v325, %v652
      %v654 = vpop.f32.mrb[0].mxu0
      %v655 = vpop.f32.mrb[0].mxu0
      %v656 = vadd.f32 %v325, %v655
      %v657 = vpop.f32.mrb[0].mxu0
      %658 = vmatprep.mubr.bf16.mxu0 0
      %659 = vmatmul.mubr.bf16.gmra.mrb[0].mxu0 %v362
      %v660 = vpop.f32.mrb[0].mxu0
      %v661 = vadd.f32 %v325, %v660
      %v662 = vpop.f32.mrb[0].mxu0
      %v663 = vpop.f32.mrb[0].mxu0
      %v664 = vadd.f32 %v325, %v663
      %v665 = vpop.f32.mrb[0].mxu0
      %666 = vmatprep.mubr.bf16.mxu0 0
      %667 = vmatmul.mubr.bf16.gmra.mrb[0].mxu0 %v363
      %v668 = vpop.f32.mrb[0].mxu0
      %v669 = vadd.f32 %v325, %v668
      %v670 = vpop.f32.mrb[0].mxu0
      %v671 = vpop.f32.mrb[0].mxu0
      %v672 = vadd.f32 %v325, %v671
      %v673 = vpop.f32.mrb[0].mxu0
      %674 = vmatprep.mubr.bf16.mxu0 0
      %675 = vmatmul.mubr.bf16.gmra.mrb[0].mxu0 %v364
      %v676 = vpop.f32.mrb[0].mxu0
      %v677 = vadd.f32 %v325, %v676
      %v678 = vpop.f32.mrb[0].mxu0
      %v679 = vpop.f32.mrb[0].mxu0
      %v680 = vadd.f32 %v325, %v679
      %v681 = vpop.f32.mrb[0].mxu0
      %682 = vmatprep.mubr.bf16.mxu0 0
      %683 = vmatmul.mubr.bf16.gmra.mrb[0].mxu0 %v365
      %v684 = vpop.f32.mrb[0].mxu0
      %v685 = vadd.f32 %v325, %v684
      %v686 = vpop.f32.mrb[0].mxu0
      %v687 = vpop.f32.mrb[0].mxu0
      %v688 = vadd.f32 %v325, %v687
      %v689 = vpop.f32.mrb[0].mxu0
      %690 = vmatprep.mubr.bf16.mxu0 0
      %691 = vmatmul.mubr.bf16.gmra.mrb[0].mxu0 %v366
      %v692 = vpop.f32.mrb[0].mxu0
      %v693 = vadd.f32 %v325, %v692
      %v694 = vpop.f32.mrb[0].mxu0
      %v695 = vpop.f32.mrb[0].mxu0
      %v696 = vadd.f32 %v325, %v695
      %v697 = vpop.f32.mrb[0].mxu0
      %698 = vmatprep.mubr.bf16.mxu0 0
      %699 = vmatmul.mubr.bf16.gmra.mrb[0].mxu0 %v367
      %v700 = vpop.f32.mrb[0].mxu0
      %v701 = vadd.f32 %v325, %v700
      %v702 = vpop.f32.mrb[0].mxu0
      %v703 = vpop.f32.mrb[0].mxu0
      %v704 = vadd.f32 %v325, %v703
      %v705 = vpop.f32.mrb[0].mxu0
      %706 = vmatprep.mubr.bf16.mxu0 0
      %707 = vmatmul.mubr.bf16.gmra.mrb[0].mxu0 %v368
      %v708 = vpop.f32.mrb[0].mxu0
      %v709 = vadd.f32 %v325, %v708
      %v710 = vpop.f32.mrb[0].mxu0
      %v711 = vpop.f32.mrb[0].mxu0
      %v712 = vadd.f32 %v325, %v711
      %v713 = vpop.f32.mrb[0].mxu0
      %714 = vdwg.mxu0
      %v715 = vpack.c.bf16 %v544, %v540
      %v716 = vpack.c.bf16 %v554, %v550
      %v717 = vpack.c.bf16 %v564, %v560
      %v718 = vpack.c.bf16 %v574, %v570
      %v719 = vpack.c.bf16 %v584, %v580
      %v720 = vpack.c.bf16 %v594, %v590
      %v721 = vpack.c.bf16 %v604, %v600
      %v722 = vpack.c.bf16 %v614, %v610
      %v731 = vunpack.c.l.b16 %v715
      %v732 = vunpack.c.h.b16 %v715
      %v733 = vunpack.c.l.b16 %v716
      %v734 = vunpack.c.h.b16 %v716
      %v735 = vunpack.c.l.b16 %v717
      %v736 = vunpack.c.h.b16 %v717
      %v737 = vunpack.c.l.b16 %v718
      %v738 = vunpack.c.h.b16 %v718
      %v739 = vunpack.c.l.b16 %v719
      %v740 = vunpack.c.h.b16 %v719
      %v741 = vunpack.c.l.b16 %v720
      %v742 = vunpack.c.h.b16 %v720
      %v743 = vunpack.c.l.b16 %v721
      %v744 = vunpack.c.h.b16 %v721
      %v745 = vunpack.c.l.b16 %v722
      %v746 = vunpack.c.h.b16 %v722
      %v747 = vpack.c.b16 %v731, %v731
      %v748 = vpack.c.b16 %v732, %v732
      %v749 = vpack.c.b16 %v733, %v733
      %v750 = vpack.c.b16 %v734, %v734
      %v751 = vpack.c.b16 %v735, %v735
      %v752 = vpack.c.b16 %v736, %v736
      %v753 = vpack.c.b16 %v737, %v737
      %v754 = vpack.c.b16 %v738, %v738
      %v755 = vpack.c.b16 %v739, %v739
      %v756 = vpack.c.b16 %v740, %v740
      %v757 = vpack.c.b16 %v741, %v741
      %v758 = vpack.c.b16 %v742, %v742
      %v759 = vpack.c.b16 %v743, %v743
      %v760 = vpack.c.b16 %v744, %v744
      %v761 = vpack.c.b16 %v745, %v745
      %v762 = vpack.c.b16 %v746, %v746
      %779 = vst [vmem:[%s250] sm:$0xf] %v747
      %780 = vst [vmem:[%s250 + $0x4] sm:$0xf] %v748
      %781 = vst [vmem:[%s250 + $0x8] sm:$0xf] %v749
      %782 = vst [vmem:[%s250 + $0xc] sm:$0xf] %v750
      %783 = vst [vmem:[%s250 + $0x10] sm:$0xf] %v751
      %784 = vst [vmem:[%s250 + $0x14] sm:$0xf] %v752
      %785 = vst [vmem:[%s250 + $0x18] sm:$0xf] %v753
      %786 = vst [vmem:[%s250 + $0x1c] sm:$0xf] %v754
      %787 = vst [vmem:[%s250 + $0x20] sm:$0xf] %v755
      %788 = vst [vmem:[%s250 + $0x24] sm:$0xf] %v756
      %789 = vst [vmem:[%s250 + $0x28] sm:$0xf] %v757
      %790 = vst [vmem:[%s250 + $0x2c] sm:$0xf] %v758
      %791 = vst [vmem:[%s250 + $0x30] sm:$0xf] %v759
      %792 = vst [vmem:[%s250 + $0x34] sm:$0xf] %v760
      %793 = vst [vmem:[%s250 + $0x38] sm:$0xf] %v761
      %794 = vst [vmem:[%s250 + $0x3c] sm:$0xf] %v762
      %v795 = vpack.c.bf16 %v546, %v542
      %v796 = vpack.c.bf16 %v656, %v653
      %v797 = vpack.c.bf16 %v556, %v552
      %v798 = vpack.c.bf16 %v664, %v661
      %v799 = vpack.c.bf16 %v566, %v562
      %v800 = vpack.c.bf16 %v672, %v669
      %v801 = vpack.c.bf16 %v576, %v572
      %v802 = vpack.c.bf16 %v680, %v677
      %v803 = vpack.c.bf16 %v586, %v582
      %v804 = vpack.c.bf16 %v688, %v685
      %v805 = vpack.c.bf16 %v596, %v592
      %v806 = vpack.c.bf16 %v696, %v693
      %v807 = vpack.c.bf16 %v606, %v602
      %v808 = vpack.c.bf16 %v704, %v701
      %v809 = vpack.c.bf16 %v616, %v612
      %v810 = vpack.c.bf16 %v712, %v709
      %v827 = vunpack.c.l.b16 %v795
      %v828 = vunpack.c.l.b16 %v796
      %v829 = vunpack.c.h.b16 %v795
      %v830 = vunpack.c.h.b16 %v796
      %v831 = vunpack.c.l.b16 %v797
      %v832 = vunpack.c.l.b16 %v798
      %v833 = vunpack.c.h.b16 %v797
      %v834 = vunpack.c.h.b16 %v798
      %v835 = vunpack.c.l.b16 %v799
      %v836 = vunpack.c.l.b16 %v800
      %v837 = vunpack.c.h.b16 %v799
      %v838 = vunpack.c.h.b16 %v800
      %v839 = vunpack.c.l.b16 %v801
      %v840 = vunpack.c.l.b16 %v802
      %v841 = vunpack.c.h.b16 %v801
      %v842 = vunpack.c.h.b16 %v802
      %v843 = vunpack.c.l.b16 %v803
      %v844 = vunpack.c.l.b16 %v804
      %v845 = vunpack.c.h.b16 %v803
      %v846 = vunpack.c.h.b16 %v804
      %v847 = vunpack.c.l.b16 %v805
      %v848 = vunpack.c.l.b16 %v806
      %v849 = vunpack.c.h.b16 %v805
      %v850 = vunpack.c.h.b16 %v806
      %v851 = vunpack.c.l.b16 %v807
      %v852 = vunpack.c.l.b16 %v808
      %v853 = vunpack.c.h.b16 %v807
      %v854 = vunpack.c.h.b16 %v808
      %v855 = vunpack.c.l.b16 %v809
      %v856 = vunpack.c.l.b16 %v810
      %v857 = vunpack.c.h.b16 %v809
      %v858 = vunpack.c.h.b16 %v810
      %v859 = vpack.c.b16 %v828, %v827
      %v860 = vpack.c.b16 %v830, %v829
      %v861 = vpack.c.b16 %v832, %v831
      %v862 = vpack.c.b16 %v834, %v833
      %v863 = vpack.c.b16 %v836, %v835
      %v864 = vpack.c.b16 %v838, %v837
      %v865 = vpack.c.b16 %v840, %v839
      %v866 = vpack.c.b16 %v842, %v841
      %v867 = vpack.c.b16 %v844, %v843
      %v868 = vpack.c.b16 %v846, %v845
      %v869 = vpack.c.b16 %v848, %v847
      %v870 = vpack.c.b16 %v850, %v849
      %v871 = vpack.c.b16 %v852, %v851
      %v872 = vpack.c.b16 %v854, %v853
      %v873 = vpack.c.b16 %v856, %v855
      %v874 = vpack.c.b16 %v858, %v857
      %891 = vst [vmem:[%s261] sm:$0xff] %v859
      %892 = vst [vmem:[%s261 + $0x8] sm:$0xff] %v860
      %893 = vst [vmem:[%s261 + $0x10] sm:$0xff] %v861
      %894 = vst [vmem:[%s261 + $0x18] sm:$0xff] %v862
      %895 = vst [vmem:[%s261 + $0x20] sm:$0xff] %v863
      %896 = vst [vmem:[%s261 + $0x28] sm:$0xff] %v864
      %897 = vst [vmem:[%s261 + $0x30] sm:$0xff] %v865
      %898 = vst [vmem:[%s261 + $0x38] sm:$0xff] %v866
      %899 = vst [vmem:[%s261 + $0x40] sm:$0xff] %v867
      %900 = vst [vmem:[%s261 + $0x48] sm:$0xff] %v868
      %901 = vst [vmem:[%s261 + $0x50] sm:$0xff] %v869
      %902 = vst [vmem:[%s261 + $0x58] sm:$0xff] %v870
      %903 = vst [vmem:[%s261 + $0x60] sm:$0xff] %v871
      %904 = vst [vmem:[%s261 + $0x68] sm:$0xff] %v872
      %905 = vst [vmem:[%s261 + $0x70] sm:$0xff] %v873
      %906 = vst [vmem:[%s261 + $0x78] sm:$0xff] %v874
      %s907 = smul.u32 16, %s21
      %p908 = scmp.lt.s32.totalorder %s20, 1
      %s909 = scalar_select %p908, %s20, 1
      %p910 = scmp.lt.s32.totalorder %s907, 31
      %s911 = scalar_select %p910, %s907, 31
      %s912 = smul.addr %s909, 32
      %s913 = sadd.s32 %s911, %s912
      %s914 = smul.addr %s913, 4
      %s915 = scalar_lea.vmem %s3, %s914
      %s916 = smul.u32 16, %s21
      %p917 = scmp.lt.s32.totalorder %s20, 1
      %s918 = scalar_select %p917, %s20, 1
      %p919 = scmp.lt.s32.totalorder %s916, 31
      %s920 = scalar_select %p919, %s916, 31
      %s921 = smul.addr %s920, 2
      %s922 = smul.addr %s918, 64
      %s923 = sadd.s32 %s921, %s922
      %s924 = smul.addr %s923, 4
      %s925 = scalar_lea.vmem %s4, %s924
      // Predicated region
      $region33: #{nonlocal_block.2} parent=31 // pred_check
        %p926 = pneg %p118
      $region34: #{nonlocal_block.2} parent=31 // pred_check_branch
        %928 = sbr.rel (%p926) target = $region36
      $region35: #{nonlocal_block.2} parent=31 // pred_region
        %s929 = smul.u32 16, %s21
      $region36: #{nonlocal_block.2} parent=31 // pred_fallthru
        _
      // Predicated region
      $region37: #{nonlocal_block.2} parent=31 // pred_check
        %p930 = pneg %p146
      $region38: #{nonlocal_block.2} parent=31 // pred_check_branch
        %932 = sbr.rel (%p930) target = $region40
      $region39: #{nonlocal_block.2} parent=31 // pred_region
        %s933 = smul.u32 16, %s21
      $region40: #{nonlocal_block.2} parent=31 // pred_fallthru
        _
    $region32: #{nonlocal_block.2} parent=5 // pred_fallthru
      _
    %p934 = scmp.le.s32.totalorder 2, %s11
    // Predicated region
    $region41: #{nonlocal_block.2} parent=5 // pred_check
      %p935 = pneg %p934
    $region42: #{nonlocal_block.2} parent=5 // pred_check_branch
      %937 = sbr.rel (%p935) target = $region44
    $region43: #{nonlocal_block.2} parent=5 // pred_region
      %s938 = ssub.s32 %s11, 2
      // Predicated region
      $region45: #{nonlocal_block.2} parent=43 // pred_check
        %p939 = pneg %p124
      $region46: #{nonlocal_block.2} parent=43 // pred_check_branch
        %941 = sbr.rel (%p939) target = $region48
      $region47: #{nonlocal_block.2} parent=43 // pred_region
        %s942 = smul.u32 16, %s23
        %p943 = scmp.lt.s32.totalorder %s22, 1
        %s944 = scalar_select %p943, %s22, 1
        %p945 = scmp.lt.s32.totalorder %s942, 31
        %s946 = scalar_select %p945, %s942, 31
        %s947 = smul.addr %s944, 32
        %s948 = sadd.s32 %s946, %s947
        %s949 = smul.addr %s948, 4
        %s950 = scalar_lea.vmem %s3, %s949
      $region48: #{nonlocal_block.2} parent=43 // pred_fallthru
        _
      // Predicated region
      $region49: #{nonlocal_block.2} parent=43 // pred_check
        %p951 = pneg %p152
      $region50: #{nonlocal_block.2} parent=43 // pred_check_branch
        %953 = sbr.rel (%p951) target = $region52
      $region51: #{nonlocal_block.2} parent=43 // pred_region
        %s954 = smul.u32 16, %s23
        %p955 = scmp.lt.s32.totalorder %s22, 1
        %s956 = scalar_select %p955, %s22, 1
        %p957 = scmp.lt.s32.totalorder %s954, 31
        %s958 = scalar_select %p957, %s954, 31
        %s959 = smul.addr %s958, 2
        %s960 = smul.addr %s956, 64
        %s961 = sadd.s32 %s959, %s960
        %s962 = smul.addr %s961, 4
        %s963 = scalar_lea.vmem %s4, %s962
      $region52: #{nonlocal_block.2} parent=43 // pred_fallthru
        _
    $region44: #{nonlocal_block.2} parent=5 // pred_fallthru
      _
  $region6: #{nonlocal_block.2} parent=0 // loop_footer
    %s15 = sadd.s32 1, %s11
  $region7: #{nonlocal_block.2} parent=0 // loop_footer_branch
    %10 = sbr.rel target = $region3
  $region8: #{nonlocal_block.2} parent=0 // loop_exit
    _

// kernel: nonlocal_block.3
$region0: #{nonlocal_block.3}
  #allocation0 [shape = 'u32[]', space=smem, size = 0x4, offset = 0x4, fixed_abs, tag = 'smem constant byte address 0x4 - core index']
  #allocation1 [shape = 'u32[144,128]{1,0:T(1,128)}', space=vmem, size = 0x12000, scoped, tag = 'internal scratch']
  #allocation2 [shape = 'f32[128,1]{1,0:T(8,128)}', space=vmem, size = 0x10000, scoped, tag = 'scratch operand']
  #allocation3 [shape = 'f32[128,1]{1,0:T(8,128)}', space=vmem, size = 0x10000, scoped, tag = 'scratch operand']
  #allocation4 [shape = 'f32[128,128]{1,0:T(8,128)}', space=vmem, size = 0x10000, scoped, tag = 'scratch operand']
  %s0 = inlined_call_operand.vmem [shape: f32[2,256,128], index: 0, kind: input, shape index: {}]
  %s1 = inlined_call_operand.vmem [shape: bf16[2,256,128], index: 1, kind: input, shape index: {}]
  %s2 = inlined_call_operand.vmem [shape: bf16[2,256,256], index: 2, kind: input, shape index: {}]
  %s3 = inlined_call_operand.vmem [shape: bf16[128,128], index: 3, kind: input, shape index: {}]
  %s4 = inlined_call_operand.vmem [shape: f32[1,128], index: 4, kind: input, shape index: {}]
  %s5 = inlined_call_operand.vmem [shape: f32[2,256,128], index: 5, kind: output, shape index: {}]
  %s6 = sld [smem:[#allocation0]]
  $region61: #{nonlocal_block.3} parent=0
    _
  %s8 = ssub.s32 1, %s6
  %s9 = scalar_select 0, %s8, %s6
  loop: start=0, step=1, limit=10
  $region2: #{nonlocal_block.3} parent=0 // loop_pre_header
    _
  $region3: #{nonlocal_block.3} parent=0 // loop_header
    %s11 = sphi 0, %s15
    %p12 = scmp.ge.s32.totalorder %s11, 10
    %s18 = sphi 0, %s37
    %s19 = sphi 0, %s33
    %s20 = sphi 0, %s29
    %s21 = sphi 0, %s18
    %s22 = sphi 0, %s19
    %s23 = sphi 0, %s20
    %s24 = sphi 0, %s21
    %s25 = sphi 0, %s22
    %s26 = sphi 0, %s23
    %s42 = sphi 0, %s44
    %s45 = sphi 0, %s42
    %s46 = sphi 0, %s45
    %s62 = sphi 0, %s46
    %s70 = sphi 0, %s72
    %s73 = sphi 0, %s70
    %s74 = sphi 0, %s73
    %s90 = sphi 0, %s74
    %s98 = sphi 0, %s100
    %s101 = sphi 0, %s98
    %s102 = sphi 0, %s101
    %s118 = sphi 0, %s102
    %s122 = sphi 0, %s122
    %s124 = sphi 0, %s122
    %s125 = sphi 0, %s124
    %s139 = sphi 0, %s125
    %s143 = sphi 0, %s143
    %s145 = sphi 0, %s143
    %s146 = sphi 0, %s145
    %s160 = sphi 0, %s146
    %s168 = sphi 0, %s170
    %s171 = sphi 0, %s168
    %s172 = sphi 0, %s171
    %s188 = sphi 0, %s172
  $region4: #{nonlocal_block.3} parent=0 // loop_header_branch
    %14 = sbr.rel (%p12) target = $region8
  $region5: #{nonlocal_block.3} parent=0 // loop_body
    %s16 = ssub.s32 %s11, 1
    %s17 = ssub.s32 %s11, 2
    %s27 = sadd.s32 1, %s20
    %p28 = scmp.ge.s32.totalorder %s27, 2
    %s29 = scalar_select %p28, 0, %s27
    %s30 = sadd.s32 1, %s19
    %s31 = scalar_select %p28, %s30, %s19
    %p32 = scmp.ge.s32.totalorder %s31, 2
    %s33 = scalar_select %p32, 0, %s31
    %s34 = sadd.s32 1, %s18
    %s35 = scalar_select %p32, %s34, %s18
    %p36 = scmp.ge.s32.totalorder %s35, 2
    %s37 = scalar_select %p36, 0, %s35
    %s38 = ssub.s32 %s18, %s37
    %s39 = ssub.s32 %s19, %s33
    %s40 = sor.u32 %s38, %s39
    %p41 = scmp.eq.s32.totalorder %s40, 0
    %s43 = sadd.s32 %s42, 1
    %s44 = scalar_select %p41, %s42, %s43
    %p47 = pneg %p41
    %p48 = scmp.eq.s32.totalorder %s11, 7
    %p49 = por %p47, %p48
    %p50 = scmp.ne.s32.totalorder %s42, %s45
    %p51 = scmp.eq.s32.totalorder %s11, 0
    %p52 = por %p50, %p51
    %p53 = scmp.ne.s32.totalorder %s42, %s45
    %p54 = scmp.eq.s32.totalorder %s16, 7
    %p55 = por %p53, %p54
    %p56 = scmp.ne.s32.totalorder %s45, %s46
    %p57 = scmp.eq.s32.totalorder %s16, 0
    %p58 = por %p56, %p57
    %p59 = scmp.ne.s32.totalorder %s45, %s46
    %p60 = scmp.eq.s32.totalorder %s17, 7
    %p61 = por %p59, %p60
    %p63 = scmp.ne.s32.totalorder %s46, %s62
    %p64 = scmp.eq.s32.totalorder %s17, 0
    %p65 = por %p63, %p64
    %s66 = ssub.s32 %s18, %s37
    %s67 = ssub.s32 %s19, %s33
    %s68 = sor.u32 %s66, %s67
    %p69 = scmp.eq.s32.totalorder %s68, 0
    %s71 = sadd.s32 %s70, 1
    %s72 = scalar_select %p69, %s70, %s71
    %p75 = pneg %p69
    %p76 = scmp.eq.s32.totalorder %s11, 7
    %p77 = por %p75, %p76
    %p78 = scmp.ne.s32.totalorder %s70, %s73
    %p79 = scmp.eq.s32.totalorder %s11, 0
    %p80 = por %p78, %p79
    %p81 = scmp.ne.s32.totalorder %s70, %s73
    %p82 = scmp.eq.s32.totalorder %s16, 7
    %p83 = por %p81, %p82
    %p84 = scmp.ne.s32.totalorder %s73, %s74
    %p85 = scmp.eq.s32.totalorder %s16, 0
    %p86 = por %p84, %p85
    %p87 = scmp.ne.s32.totalorder %s73, %s74
    %p88 = scmp.eq.s32.totalorder %s17, 7
    %p89 = por %p87, %p88
    %p91 = scmp.ne.s32.totalorder %s74, %s90
    %p92 = scmp.eq.s32.totalorder %s17, 0
    %p93 = por %p91, %p92
    %s94 = ssub.s32 %s18, %s37
    %s95 = ssub.s32 %s20, %s29
    %s96 = sor.u32 %s94, %s95
    %p97 = scmp.eq.s32.totalorder %s96, 0
    %s99 = sadd.s32 %s98, 1
    %s100 = scalar_select %p97, %s98, %s99
    %p103 = pneg %p97
    %p104 = scmp.eq.s32.totalorder %s11, 7
    %p105 = por %p103, %p104
    %p106 = scmp.ne.s32.totalorder %s98, %s101
    %p107 = scmp.eq.s32.totalorder %s11, 0
    %p108 = por %p106, %p107
    %p109 = scmp.ne.s32.totalorder %s98, %s101
    %p110 = scmp.eq.s32.totalorder %s16, 7
    %p111 = por %p109, %p110
    %p112 = scmp.ne.s32.totalorder %s101, %s102
    %p113 = scmp.eq.s32.totalorder %s16, 0
    %p114 = por %p112, %p113
    %p115 = scmp.ne.s32.totalorder %s101, %s102
    %p116 = scmp.eq.s32.totalorder %s17, 7
    %p117 = por %p115, %p116
    %p119 = scmp.ne.s32.totalorder %s102, %s118
    %p120 = scmp.eq.s32.totalorder %s17, 0
    %p121 = por %p119, %p120
    %s123 = sadd.s32 %s122, 1
    %p126 = scmp.eq.s32.totalorder %s11, 7
    %p127 = scmp.ne.s32.totalorder %s122, %s124
    %p128 = scmp.eq.s32.totalorder %s11, 0
    %p129 = por %p127, %p128
    %p130 = scmp.ne.s32.totalorder %s122, %s124
    %p131 = scmp.eq.s32.totalorder %s16, 7
    %p132 = por %p130, %p131
    %p133 = scmp.ne.s32.totalorder %s124, %s125
    %p134 = scmp.eq.s32.totalorder %s16, 0
    %p135 = por %p133, %p134
    %p136 = scmp.ne.s32.totalorder %s124, %s125
    %p137 = scmp.eq.s32.totalorder %s17, 7
    %p138 = por %p136, %p137
    %p140 = scmp.ne.s32.totalorder %s125, %s139
    %p141 = scmp.eq.s32.totalorder %s17, 0
    %p142 = por %p140, %p141
    %s144 = sadd.s32 %s143, 1
    %p147 = scmp.eq.s32.totalorder %s11, 7
    %p148 = scmp.ne.s32.totalorder %s143, %s145
    %p149 = scmp.eq.s32.totalorder %s11, 0
    %p150 = por %p148, %p149
    %p151 = scmp.ne.s32.totalorder %s143, %s145
    %p152 = scmp.eq.s32.totalorder %s16, 7
    %p153 = por %p151, %p152
    %p154 = scmp.ne.s32.totalorder %s145, %s146
    %p155 = scmp.eq.s32.totalorder %s16, 0
    %p156 = por %p154, %p155
    %p157 = scmp.ne.s32.totalorder %s145, %s146
    %p158 = scmp.eq.s32.totalorder %s17, 7
    %p159 = por %p157, %p158
    %p161 = scmp.ne.s32.totalorder %s146, %s160
    %p162 = scmp.eq.s32.totalorder %s17, 0
    %p163 = por %p161, %p162
    %s164 = ssub.s32 %s18, %s37
    %s165 = ssub.s32 %s19, %s33
    %s166 = sor.u32 %s164, %s165
    %p167 = scmp.eq.s32.totalorder %s166, 0
    %s169 = sadd.s32 %s168, 1
    %s170 = scalar_select %p167, %s168, %s169
    %p173 = pneg %p167
    %p174 = scmp.eq.s32.totalorder %s11, 7
    %p175 = por %p173, %p174
    %p176 = scmp.ne.s32.totalorder %s168, %s171
    %p177 = scmp.eq.s32.totalorder %s11, 0
    %p178 = por %p176, %p177
    %p179 = scmp.ne.s32.totalorder %s168, %s171
    %p180 = scmp.eq.s32.totalorder %s16, 7
    %p181 = por %p179, %p180
    %p182 = scmp.ne.s32.totalorder %s171, %s172
    %p183 = scmp.eq.s32.totalorder %s16, 0
    %p184 = por %p182, %p183
    %p185 = scmp.ne.s32.totalorder %s171, %s172
    %p186 = scmp.eq.s32.totalorder %s17, 7
    %p187 = por %p185, %p186
    %p189 = scmp.ne.s32.totalorder %s172, %s188
    %p190 = scmp.eq.s32.totalorder %s17, 0
    %p191 = por %p189, %p190
    %p192 = scmp.le.s32.totalorder 1, %s11
    %p193 = scmp.lt.s32.totalorder %s11, 9
    %p194 = pnand %p192, %p193
    %p195 = pneg %p194
    // Predicated region
    $region9: #{nonlocal_block.3} parent=5 // pred_check
      _
    $region10: #{nonlocal_block.3} parent=5 // pred_check_branch
      %197 = sbr.rel (%p194) target = $region12
    $region11: #{nonlocal_block.3} parent=5 // pred_region
      %s198 = ssub.s32 %s11, 1
      // Predicated region
      $region13: #{nonlocal_block.3} parent=11 // pred_check
        %p199 = pneg %p135
      $region14: #{nonlocal_block.3} parent=11 // pred_check_branch
        %201 = sbr.rel (%p199) target = $region16
      $region15: #{nonlocal_block.3} parent=11 // pred_region
        _
      $region16: #{nonlocal_block.3} parent=11 // pred_fallthru
        _
      // Predicated region
      $region17: #{nonlocal_block.3} parent=11 // pred_check
        %p202 = pneg %p156
      $region18: #{nonlocal_block.3} parent=11 // pred_check_branch
        %204 = sbr.rel (%p202) target = $region20
      $region19: #{nonlocal_block.3} parent=11 // pred_region
        _
      $region20: #{nonlocal_block.3} parent=11 // pred_fallthru
        _
    $region12: #{nonlocal_block.3} parent=5 // pred_fallthru
      _
    %p205 = scmp.lt.s32.totalorder %s11, 8
    // Predicated region
    $region21: #{nonlocal_block.3} parent=5 // pred_check
      %p206 = pneg %p205
    $region22: #{nonlocal_block.3} parent=5 // pred_check_branch
      %208 = sbr.rel (%p206) target = $region24
    $region23: #{nonlocal_block.3} parent=5 // pred_region
      // Predicated region
      $region25: #{nonlocal_block.3} parent=23 // pred_check
        %p209 = pneg %p52
      $region26: #{nonlocal_block.3} parent=23 // pred_check_branch
        %211 = sbr.rel (%p209) target = $region28
      $region27: #{nonlocal_block.3} parent=23 // pred_region
        %s212 = smul.u32 16, %s19
        %p213 = scmp.lt.s32.totalorder %s18, 1
        %s214 = scalar_select %p213, %s18, 1
        %p215 = scmp.lt.s32.totalorder %s212, 31
        %s216 = scalar_select %p215, %s212, 31
        %s217 = smul.addr %s214, 32
        %s218 = sadd.s32 %s216, %s217
        %s219 = smul.addr %s218, 8
        %s220 = scalar_lea.vmem %s0, %s219
        %s221 = smul.u32 16, %s19
      $region28: #{nonlocal_block.3} parent=23 // pred_fallthru
        _
      // Predicated region
      $region29: #{nonlocal_block.3} parent=23 // pred_check
        %p222 = pneg %p80
      $region30: #{nonlocal_block.3} parent=23 // pred_check_branch
        %224 = sbr.rel (%p222) target = $region32
      $region31: #{nonlocal_block.3} parent=23 // pred_region
        %s225 = smul.u32 16, %s19
        %p226 = scmp.lt.s32.totalorder %s18, 1
        %s227 = scalar_select %p226, %s18, 1
        %p228 = scmp.lt.s32.totalorder %s225, 31
        %s229 = scalar_select %p228, %s225, 31
        %s230 = smul.addr %s227, 32
        %s231 = sadd.s32 %s229, %s230
        %s232 = smul.addr %s231, 4
        %s233 = scalar_lea.vmem %s1, %s232
        %s234 = smul.u32 16, %s19
      $region32: #{nonlocal_block.3} parent=23 // pred_fallthru
        _
      // Predicated region
      $region33: #{nonlocal_block.3} parent=23 // pred_check
        %p235 = pneg %p108
      $region34: #{nonlocal_block.3} parent=23 // pred_check_branch
        %237 = sbr.rel (%p235) target = $region36
      $region35: #{nonlocal_block.3} parent=23 // pred_region
        %s238 = smul.u32 16, %s20
        %p239 = scmp.lt.s32.totalorder %s18, 1
        %s240 = scalar_select %p239, %s18, 1
        %p241 = scmp.lt.s32.totalorder %s238, 31
        %s242 = scalar_select %p241, %s238, 31
        %s243 = smul.addr %s242, 2
        %s244 = smul.addr %s240, 64
        %s245 = sadd.s32 %s243, %s244
        %s246 = smul.addr %s245, 4
        %s247 = scalar_lea.vmem %s2, %s246
        %s248 = smul.u32 16, %s20
      $region36: #{nonlocal_block.3} parent=23 // pred_fallthru
        _
    $region24: #{nonlocal_block.3} parent=5 // pred_fallthru
      _
    %p249 = scmp.le.s32.totalorder 1, %s11
    %p250 = scmp.lt.s32.totalorder %s11, 9
    %p251 = pnand %p249, %p250
    %p252 = pneg %p251
    // Predicated region
    $region37: #{nonlocal_block.3} parent=5 // pred_check
      _
    $region38: #{nonlocal_block.3} parent=5 // pred_check_branch
      %254 = sbr.rel (%p251) target = $region40
    $region39: #{nonlocal_block.3} parent=5 // pred_region
      %s255 = ssub.s32 %s11, 1
      %s256 = smul.u32 16, %s22
      %p257 = scmp.lt.s32.totalorder %s21, 1
      %s258 = scalar_select %p257, %s21, 1
      %p259 = scmp.lt.s32.totalorder %s256, 31
      %s260 = scalar_select %p259, %s256, 31
      %s261 = smul.addr %s258, 32
      %s262 = sadd.s32 %s260, %s261
      %s263 = smul.addr %s262, 8
      %s264 = scalar_lea.vmem %s0, %s263
      %p265 = pneg %p58
      %p266 = pneg %p55
      %s267 = smul.u32 16, %s22
      %p268 = scmp.lt.s32.totalorder %s21, 1
      %s269 = scalar_select %p268, %s21, 1
      %p270 = scmp.lt.s32.totalorder %s267, 31
      %s271 = scalar_select %p270, %s267, 31
      %s272 = smul.addr %s269, 32
      %s273 = sadd.s32 %s271, %s272
      %s274 = smul.addr %s273, 4
      %s275 = scalar_lea.vmem %s1, %s274
      %p276 = pneg %p86
      %p277 = pneg %p83
      %s278 = smul.u32 16, %s23
      %p279 = scmp.lt.s32.totalorder %s21, 1
      %s280 = scalar_select %p279, %s21, 1
      %p281 = scmp.lt.s32.totalorder %s278, 31
      %s282 = scalar_select %p281, %s278, 31
      %s283 = smul.addr %s282, 2
      %s284 = smul.addr %s280, 64
      %s285 = sadd.s32 %s283, %s284
      %s286 = smul.addr %s285, 4
      %s287 = scalar_lea.vmem %s2, %s286
      %p288 = pneg %p114
      %p289 = pneg %p111
      %p290 = pneg %p135
      %p291 = pneg %p132
      %p292 = pneg %p156
      %p293 = pneg %p153
      %p294 = pneg %p184
      %p295 = pneg %p181
      %s296 = smul.u32 16, %s22
      %p297 = scmp.lt.s32.totalorder %s21, 1
      %s298 = scalar_select %p297, %s21, 1
      %p299 = scmp.lt.s32.totalorder %s296, 31
      %s300 = scalar_select %p299, %s296, 31
      %s301 = smul.addr %s298, 32
      %s302 = sadd.s32 %s300, %s301
      %s303 = smul.addr %s302, 8
      %s304 = scalar_lea.vmem %s5, %s303
      %s305 = smul.u32 16, %s22
      %p306 = scmp.lt.s32.totalorder %s21, 1
      %s307 = scalar_select %p306, %s21, 1
      %p308 = scmp.lt.s32.totalorder %s305, 31
      %s309 = scalar_select %p308, %s305, 31
      %s310 = smul.addr %s307, 32
      %s311 = sadd.s32 %s309, %s310
      %s312 = smul.addr %s311, 8
      %s313 = scalar_lea.vmem %s0, %s312
      %s314 = smul.u32 16, %s22
      %s315 = smul.u32 16, %s22
      %p316 = scmp.lt.s32.totalorder %s21, 1
      %s317 = scalar_select %p316, %s21, 1
      %p318 = scmp.lt.s32.totalorder %s315, 31
      %s319 = scalar_select %p318, %s315, 31
      %s320 = smul.addr %s317, 32
      %s321 = sadd.s32 %s319, %s320
      %s322 = smul.addr %s321, 4
      %s323 = scalar_lea.vmem %s1, %s322
      %s324 = smul.u32 16, %s22
      %s325 = smul.u32 16, %s23
      %p326 = scmp.lt.s32.totalorder %s21, 1
      %s327 = scalar_select %p326, %s21, 1
      %p328 = scmp.lt.s32.totalorder %s325, 31
      %s329 = scalar_select %p328, %s325, 31
      %s330 = smul.addr %s329, 2
      %s331 = smul.addr %s327, 64
      %s332 = sadd.s32 %s330, %s331
      %s333 = smul.addr %s332, 4
      %s334 = scalar_lea.vmem %s2, %s333
      %s335 = smul.u32 16, %s23
      %s336 = smul.u32 16, %s22
      %p337 = scmp.lt.s32.totalorder %s21, 1
      %s338 = scalar_select %p337, %s21, 1
      %p339 = scmp.lt.s32.totalorder %s336, 31
      %s340 = scalar_select %p339, %s336, 31
      %s341 = smul.addr %s338, 32
      %s342 = sadd.s32 %s340, %s341
      %s343 = smul.addr %s342, 8
      %s344 = scalar_lea.vmem %s5, %s343
      %s345 = smul.u32 16, %s22
      %p347 = scmp.eq.s32.totalorder %s23, 0
      // Predicated region
      $region41: #{nonlocal_block.3} parent=39 // pred_check
        %p348 = pneg %p347
      $region42: #{nonlocal_block.3} parent=39 // pred_check_branch
        %350 = sbr.rel (%p348) target = $region44
      $region43: #{nonlocal_block.3} parent=39 // pred_region
        %vm351 = vcmask 7168
        %352 = vst.msk [vmem:[#allocation2] sm:$0xff] %vm351, -inf
        %353 = vst.msk [vmem:[#allocation2 + $0x8] sm:$0xff] %vm351, -inf
        %354 = vst.msk [vmem:[#allocation2 + $0x10] sm:$0xff] %vm351, -inf
        %355 = vst.msk [vmem:[#allocation2 + $0x18] sm:$0xff] %vm351, -inf
        %356 = vst.msk [vmem:[#allocation2 + $0x20] sm:$0xff] %vm351, -inf
        %357 = vst.msk [vmem:[#allocation2 + $0x28] sm:$0xff] %vm351, -inf
        %358 = vst.msk [vmem:[#allocation2 + $0x30] sm:$0xff] %vm351, -inf
        %359 = vst.msk [vmem:[#allocation2 + $0x38] sm:$0xff] %vm351, -inf
        %360 = vst.msk [vmem:[#allocation2 + $0x40] sm:$0xff] %vm351, -inf
        %361 = vst.msk [vmem:[#allocation2 + $0x48] sm:$0xff] %vm351, -inf
        %362 = vst.msk [vmem:[#allocation2 + $0x50] sm:$0xff] %vm351, -inf
        %363 = vst.msk [vmem:[#allocation2 + $0x58] sm:$0xff] %vm351, -inf
        %364 = vst.msk [vmem:[#allocation2 + $0x60] sm:$0xff] %vm351, -inf
        %365 = vst.msk [vmem:[#allocation2 + $0x68] sm:$0xff] %vm351, -inf
        %366 = vst.msk [vmem:[#allocation2 + $0x70] sm:$0xff] %vm351, -inf
        %367 = vst.msk [vmem:[#allocation2 + $0x78] sm:$0xff] %vm351, -inf
        %368 = vst.msk [vmem:[#allocation3] sm:$0xff] %vm351, 0.0
        %369 = vst.msk [vmem:[#allocation3 + $0x8] sm:$0xff] %vm351, 0.0
        %370 = vst.msk [vmem:[#allocation3 + $0x10] sm:$0xff] %vm351, 0.0
        %371 = vst.msk [vmem:[#allocation3 + $0x18] sm:$0xff] %vm351, 0.0
        %372 = vst.msk [vmem:[#allocation3 + $0x20] sm:$0xff] %vm351, 0.0
        %373 = vst.msk [vmem:[#allocation3 + $0x28] sm:$0xff] %vm351, 0.0
        %374 = vst.msk [vmem:[#allocation3 + $0x30] sm:$0xff] %vm351, 0.0
        %375 = vst.msk [vmem:[#allocation3 + $0x38] sm:$0xff] %vm351, 0.0
        %376 = vst.msk [vmem:[#allocation3 + $0x40] sm:$0xff] %vm351, 0.0
        %377 = vst.msk [vmem:[#allocation3 + $0x48] sm:$0xff] %vm351, 0.0
        %378 = vst.msk [vmem:[#allocation3 + $0x50] sm:$0xff] %vm351, 0.0
        %379 = vst.msk [vmem:[#allocation3 + $0x58] sm:$0xff] %vm351, 0.0
        %380 = vst.msk [vmem:[#allocation3 + $0x60] sm:$0xff] %vm351, 0.0
        %381 = vst.msk [vmem:[#allocation3 + $0x68] sm:$0xff] %vm351, 0.0
        %382 = vst.msk [vmem:[#allocation3 + $0x70] sm:$0xff] %vm351, 0.0
        %383 = vst.msk [vmem:[#allocation3 + $0x78] sm:$0xff] %vm351, 0.0
        %384 = vst [vmem:[#allocation4] sm:$0xff] 0.0
        %385 = vst [vmem:[#allocation4 + $0x8] sm:$0xff] 0.0
        %386 = vst [vmem:[#allocation4 + $0x10] sm:$0xff] 0.0
        %387 = vst [vmem:[#allocation4 + $0x18] sm:$0xff] 0.0
        %388 = vst [vmem:[#allocation4 + $0x20] sm:$0xff] 0.0
        %389 = vst [vmem:[#allocation4 + $0x28] sm:$0xff] 0.0
        %390 = vst [vmem:[#allocation4 + $0x30] sm:$0xff] 0.0
        %391 = vst [vmem:[#allocation4 + $0x38] sm:$0xff] 0.0
        %392 = vst [vmem:[#allocation4 + $0x40] sm:$0xff] 0.0
        %393 = vst [vmem:[#allocation4 + $0x48] sm:$0xff] 0.0
        %394 = vst [vmem:[#allocation4 + $0x50] sm:$0xff] 0.0
        %395 = vst [vmem:[#allocation4 + $0x58] sm:$0xff] 0.0
        %396 = vst [vmem:[#allocation4 + $0x60] sm:$0xff] 0.0
        %397 = vst [vmem:[#allocation4 + $0x68] sm:$0xff] 0.0
        %398 = vst [vmem:[#allocation4 + $0x70] sm:$0xff] 0.0
        %399 = vst [vmem:[#allocation4 + $0x78] sm:$0xff] 0.0
      $region44: #{nonlocal_block.3} parent=39 // pred_fallthru
        _
      %v400 = vld [vmem:[%s334] sm:$0xff]
      %v401 = vld [vmem:[%s334 + $0x8] sm:$0xff]
      %v402 = vld [vmem:[%s334 + $0x10] sm:$0xff]
      %v403 = vld [vmem:[%s334 + $0x18] sm:$0xff]
      %v404 = vld [vmem:[%s334 + $0x20] sm:$0xff]
      %v405 = vld [vmem:[%s334 + $0x28] sm:$0xff]
      %v406 = vld [vmem:[%s334 + $0x30] sm:$0xff]
      %v407 = vld [vmem:[%s334 + $0x38] sm:$0xff]
      %v408 = vld [vmem:[%s334 + $0x40] sm:$0xff]
      %v409 = vld [vmem:[%s334 + $0x48] sm:$0xff]
      %v410 = vld [vmem:[%s334 + $0x50] sm:$0xff]
      %v411 = vld [vmem:[%s334 + $0x58] sm:$0xff]
      %v412 = vld [vmem:[%s334 + $0x60] sm:$0xff]
      %v413 = vld [vmem:[%s334 + $0x68] sm:$0xff]
      %v414 = vld [vmem:[%s334 + $0x70] sm:$0xff]
      %v415 = vld [vmem:[%s334 + $0x78] sm:$0xff]
      %v416 = vld [vmem:[%s323] sm:$0xf]
      %v417 = vld [vmem:[%s323 + $0x4] sm:$0xf]
      %v418 = vld [vmem:[%s323 + $0x8] sm:$0xf]
      %v419 = vld [vmem:[%s323 + $0xc] sm:$0xf]
      %v420 = vld [vmem:[%s323 + $0x10] sm:$0xf]
      %v421 = vld [vmem:[%s323 + $0x14] sm:$0xf]
      %v422 = vld [vmem:[%s323 + $0x18] sm:$0xf]
      %v423 = vld [vmem:[%s323 + $0x1c] sm:$0xf]
      %v424 = vld [vmem:[%s323 + $0x20] sm:$0xf]
      %v425 = vld [vmem:[%s323 + $0x24] sm:$0xf]
      %v426 = vld [vmem:[%s323 + $0x28] sm:$0xf]
      %v427 = vld [vmem:[%s323 + $0x2c] sm:$0xf]
      %v428 = vld [vmem:[%s323 + $0x30] sm:$0xf]
      %v429 = vld [vmem:[%s323 + $0x34] sm:$0xf]
      %v430 = vld [vmem:[%s323 + $0x38] sm:$0xf]
      %v431 = vld [vmem:[%s323 + $0x3c] sm:$0xf]
      %v448 = vunpack.c.l.b16 %v416
      %v449 = vunpack.c.l.b16 %v417
      %v450 = vunpack.c.l.b16 %v418
      %v451 = vunpack.c.l.b16 %v419
      %v452 = vunpack.c.l.b16 %v420
      %v453 = vunpack.c.l.b16 %v421
      %v454 = vunpack.c.l.b16 %v422
      %v455 = vunpack.c.l.b16 %v423
      %v456 = vunpack.c.l.b16 %v424
      %v457 = vunpack.c.l.b16 %v425
      %v458 = vunpack.c.l.b16 %v426
      %v459 = vunpack.c.l.b16 %v427
      %v460 = vunpack.c.l.b16 %v428
      %v461 = vunpack.c.l.b16 %v429
      %v462 = vunpack.c.l.b16 %v430
      %v463 = vunpack.c.l.b16 %v431
      %v464 = vpack.c.b16 %v449, %v448
      %v465 = vpack.c.b16 %v451, %v450
      %v466 = vpack.c.b16 %v453, %v452
      %v467 = vpack.c.b16 %v455, %v454
      %v468 = vpack.c.b16 %v457, %v456
      %v469 = vpack.c.b16 %v459, %v458
      %v470 = vpack.c.b16 %v461, %v460
      %v471 = vpack.c.b16 %v463, %v462
      %v496 = vunpack.c.l.b16 %v400
      %v497 = vunpack.c.l.b16 %v401
      %v498 = vunpack.c.l.b16 %v402
      %v499 = vunpack.c.l.b16 %v403
      %v500 = vunpack.c.l.b16 %v404
      %v501 = vunpack.c.l.b16 %v405
      %v502 = vunpack.c.l.b16 %v406
      %v503 = vunpack.c.l.b16 %v407
      %v504 = vunpack.c.l.b16 %v408
      %v505 = vunpack.c.l.b16 %v409
      %v506 = vunpack.c.l.b16 %v410
      %v507 = vunpack.c.l.b16 %v411
      %v508 = vunpack.c.l.b16 %v412
      %v509 = vunpack.c.l.b16 %v413
      %v510 = vunpack.c.l.b16 %v414
      %v511 = vunpack.c.l.b16 %v415
      %v512 = vpack.c.b16 %v497, %v496
      %v513 = vpack.c.b16 %v499, %v498
      %v514 = vpack.c.b16 %v501, %v500
      %v515 = vpack.c.b16 %v503, %v502
      %v516 = vpack.c.b16 %v505, %v504
      %v517 = vpack.c.b16 %v507, %v506
      %v518 = vpack.c.b16 %v509, %v508
      %v519 = vpack.c.b16 %v511, %v510
      %528 = vmatprep.subr.bf16.mxu0 0
      %529 = vmatpush1.bf16.xpose.msra.mxu0 %v512
      %530 = vmatprep.subr.bf16.mxu0 0
      %531 = vmatpush1.bf16.xpose.msra.mxu0 %v513
      %532 = vmatprep.subr.bf16.mxu0 0
      %533 = vmatpush1.bf16.xpose.msra.mxu0 %v514
      %534 = vmatprep.subr.bf16.mxu0 0
      %535 = vmatpush1.bf16.xpose.msra.mxu0 %v515
      %536 = vmatprep.subr.bf16.mxu0 0
      %537 = vmatpush1.bf16.xpose.msra.mxu0 %v516
      %538 = vmatprep.subr.bf16.mxu0 0
      %539 = vmatpush1.bf16.xpose.msra.mxu0 %v517
      %540 = vmatprep.subr.bf16.mxu0 0
      %541 = vmatpush1.bf16.xpose.msra.mxu0 %v518
      %542 = vmatprep.subr.bf16.mxu0 0
      %543 = vmatpush1.bf16.xpose.msra.mxu0 %v519
      %544 = vmatprep.subr.bf16.mxu0 0
      %545 = vmatpush1.bf16.xpose.msra.mxu0 0
      %546 = vmatprep.subr.bf16.mxu0 0
      %547 = vmatpush1.bf16.xpose.msra.mxu0 0
      %548 = vmatprep.subr.bf16.mxu0 0
      %549 = vmatpush1.bf16.xpose.msra.mxu0 0
      %550 = vmatprep.subr.bf16.mxu0 0
      %551 = vmatpush1.bf16.xpose.msra.mxu0 0
      %552 = vmatprep.subr.bf16.mxu0 0
      %553 = vmatpush1.bf16.xpose.msra.mxu0 0
      %554 = vmatprep.subr.bf16.mxu0 0
      %555 = vmatpush1.bf16.xpose.msra.mxu0 0
      %556 = vmatprep.subr.bf16.mxu0 0
      %557 = vmatpush1.bf16.xpose.msra.mxu0 0
      %558 = vmatprep.subr.bf16.mxu0 0
      %559 = vmatpush1.bf16.xpose.msra.mxu0 0
      %560 = vmatprep.mubr.bf16.mxu0 0
      %561 = vmatmul.mubr.bf16.gmra.mrb[0].mxu0 %v464
      %v562 = vpop.f32.mrb[0].mxu0
      %v563 = vadd.f32 0.0, %v562
      %v564 = vpop.f32.mrb[0].mxu0
      %v565 = vpop.f32.mrb[0].mxu0
      %v566 = vadd.f32 0.0, %v565
      %v567 = vpop.f32.mrb[0].mxu0
      %568 = vmatprep.mubr.bf16.mxu0 0
      %569 = vmatmul.mubr.bf16.gmra.mrb[0].mxu0 %v465
      %v570 = vpop.f32.mrb[0].mxu0
      %v571 = vadd.f32 0.0, %v570
      %v572 = vpop.f32.mrb[0].mxu0
      %v573 = vpop.f32.mrb[0].mxu0
      %v574 = vadd.f32 0.0, %v573
      %v575 = vpop.f32.mrb[0].mxu0
      %576 = vmatprep.mubr.bf16.mxu0 0
      %577 = vmatmul.mubr.bf16.gmra.mrb[0].mxu0 %v466
      %v578 = vpop.f32.mrb[0].mxu0
      %v579 = vadd.f32 0.0, %v578
      %v580 = vpop.f32.mrb[0].mxu0
      %v581 = vpop.f32.mrb[0].mxu0
      %v582 = vadd.f32 0.0, %v581
      %v583 = vpop.f32.mrb[0].mxu0
      %584 = vmatprep.mubr.bf16.mxu0 0
      %585 = vmatmul.mubr.bf16.gmra.mrb[0].mxu0 %v467
      %v586 = vpop.f32.mrb[0].mxu0
      %v587 = vadd.f32 0.0, %v586
      %v588 = vpop.f32.mrb[0].mxu0
      %v589 = vpop.f32.mrb[0].mxu0
      %v590 = vadd.f32 0.0, %v589
      %v591 = vpop.f32.mrb[0].mxu0
      %592 = vmatprep.mubr.bf16.mxu0 0
      %593 = vmatmul.mubr.bf16.gmra.mrb[0].mxu0 %v468
      %v594 = vpop.f32.mrb[0].mxu0
      %v595 = vadd.f32 0.0, %v594
      %v596 = vpop.f32.mrb[0].mxu0
      %v597 = vpop.f32.mrb[0].mxu0
      %v598 = vadd.f32 0.0, %v597
      %v599 = vpop.f32.mrb[0].mxu0
      %600 = vmatprep.mubr.bf16.mxu0 0
      %601 = vmatmul.mubr.bf16.gmra.mrb[0].mxu0 %v469
      %v602 = vpop.f32.mrb[0].mxu0
      %v603 = vadd.f32 0.0, %v602
      %v604 = vpop.f32.mrb[0].mxu0
      %v605 = vpop.f32.mrb[0].mxu0
      %v606 = vadd.f32 0.0, %v605
      %v607 = vpop.f32.mrb[0].mxu0
      %608 = vmatprep.mubr.bf16.mxu0 0
      %609 = vmatmul.mubr.bf16.gmra.mrb[0].mxu0 %v470
      %v610 = vpop.f32.mrb[0].mxu0
      %v611 = vadd.f32 0.0, %v610
      %v612 = vpop.f32.mrb[0].mxu0
      %v613 = vpop.f32.mrb[0].mxu0
      %v614 = vadd.f32 0.0, %v613
      %v615 = vpop.f32.mrb[0].mxu0
      %616 = vmatprep.mubr.bf16.mxu0 0
      %617 = vmatmul.mubr.bf16.gmra.mrb[0].mxu0 %v471
      %v618 = vpop.f32.mrb[0].mxu0
      %v619 = vadd.f32 0.0, %v618
      %v620 = vpop.f32.mrb[0].mxu0
      %v621 = vpop.f32.mrb[0].mxu0
      %v622 = vadd.f32 0.0, %v621
      %v623 = vpop.f32.mrb[0].mxu0
      %624 = vdwg.mxu0
      %v625 = vld [vmem:[#allocation2] sm:$0xff]
      %v626 = vld [vmem:[#allocation2 + $0x8] sm:$0xff]
      %v627 = vld [vmem:[#allocation2 + $0x10] sm:$0xff]
      %v628 = vld [vmem:[#allocation2 + $0x18] sm:$0xff]
      %v629 = vld [vmem:[#allocation2 + $0x20] sm:$0xff]
      %v630 = vld [vmem:[#allocation2 + $0x28] sm:$0xff]
      %v631 = vld [vmem:[#allocation2 + $0x30] sm:$0xff]
      %v632 = vld [vmem:[#allocation2 + $0x38] sm:$0xff]
      %v633 = vld [vmem:[#allocation2 + $0x40] sm:$0xff]
      %v634 = vld [vmem:[#allocation2 + $0x48] sm:$0xff]
      %v635 = vld [vmem:[#allocation2 + $0x50] sm:$0xff]
      %v636 = vld [vmem:[#allocation2 + $0x58] sm:$0xff]
      %v637 = vld [vmem:[#allocation2 + $0x60] sm:$0xff]
      %v638 = vld [vmem:[#allocation2 + $0x68] sm:$0xff]
      %v639 = vld [vmem:[#allocation2 + $0x70] sm:$0xff]
      %v640 = vld [vmem:[#allocation2 + $0x78] sm:$0xff]
      %641 = vmax.xlane.f32.xlu0 %v563
      %v642 = vpop.xlane.xlu0 %641
      %643 = vmax.xlane.f32.xlu0 %v566
      %v644 = vpop.xlane.xlu0 %643
      %645 = vmax.xlane.f32.xlu0 %v571
      %v646 = vpop.xlane.xlu0 %645
      %647 = vmax.xlane.f32.xlu0 %v574
      %v648 = vpop.xlane.xlu0 %647
      %649 = vmax.xlane.f32.xlu0 %v579
      %v650 = vpop.xlane.xlu0 %649
      %651 = vmax.xlane.f32.xlu0 %v582
      %v652 = vpop.xlane.xlu0 %651
      %653 = vmax.xlane.f32.xlu0 %v587
      %v654 = vpop.xlane.xlu0 %653
      %655 = vmax.xlane.f32.xlu0 %v590
      %v656 = vpop.xlane.xlu0 %655
      %657 = vmax.xlane.f32.xlu0 %v595
      %v658 = vpop.xlane.xlu0 %657
      %659 = vmax.xlane.f32.xlu0 %v598
      %v660 = vpop.xlane.xlu0 %659
      %661 = vmax.xlane.f32.xlu0 %v603
      %v662 = vpop.xlane.xlu0 %661
      %663 = vmax.xlane.f32.xlu0 %v606
      %v664 = vpop.xlane.xlu0 %663
      %665 = vmax.xlane.f32.xlu0 %v611
      %v666 = vpop.xlane.xlu0 %665
      %667 = vmax.xlane.f32.xlu0 %v614
      %v668 = vpop.xlane.xlu0 %667
      %669 = vmax.xlane.f32.xlu0 %v619
      %v670 = vpop.xlane.xlu0 %669
      %671 = vmax.xlane.f32.xlu0 %v622
      %v672 = vpop.xlane.xlu0 %671
      %v673 = vmax.f32 %v625, %v642
      %v674 = vmax.f32 %v626, %v644
      %v675 = vmax.f32 %v627, %v646
      %v676 = vmax.f32 %v628, %v648
      %v677 = vmax.f32 %v629, %v650
      %v678 = vmax.f32 %v630, %v652
      %v679 = vmax.f32 %v631, %v654
      %v680 = vmax.f32 %v632, %v656
      %v681 = vmax.f32 %v633, %v658
      %v682 = vmax.f32 %v634, %v660
      %v683 = vmax.f32 %v635, %v662
      %v684 = vmax.f32 %v636, %v664
      %v685 = vmax.f32 %v637, %v666
      %v686 = vmax.f32 %v638, %v668
      %v687 = vmax.f32 %v639, %v670
      %v688 = vmax.f32 %v640, %v672
      %v689 = vsub.f32 %v625, %v673
      %v690 = vsub.f32 %v626, %v674
      %v691 = vsub.f32 %v627, %v675
      %v692 = vsub.f32 %v628, %v676
      %v693 = vsub.f32 %v629, %v677
      %v694 = vsub.f32 %v630, %v678
      %v695 = vsub.f32 %v631, %v679
      %v696 = vsub.f32 %v632, %v680
      %v697 = vsub.f32 %v633, %v681
      %v698 = vsub.f32 %v634, %v682
      %v699 = vsub.f32 %v635, %v683
      %v700 = vsub.f32 %v636, %v684
      %v701 = vsub.f32 %v637, %v685
      %v702 = vsub.f32 %v638, %v686
      %v703 = vsub.f32 %v639, %v687
      %v704 = vsub.f32 %v640, %v688
      %v705 = vmul.f32 %v689, 1.442695
      %v706 = vpow.pop %v705
      %v707 = vmul.f32 %v690, 1.442695
      %v708 = vpow.pop %v707
      %v709 = vmul.f32 %v691, 1.442695
      %v710 = vpow.pop %v709
      %v711 = vmul.f32 %v692, 1.442695
      %v712 = vpow.pop %v711
      %v713 = vmul.f32 %v693, 1.442695
      %v714 = vpow.pop %v713
      %v715 = vmul.f32 %v694, 1.442695
      %v716 = vpow.pop %v715
      %v717 = vmul.f32 %v695, 1.442695
      %v718 = vpow.pop %v717
      %v719 = vmul.f32 %v696, 1.442695
      %v720 = vpow.pop %v719
      %v721 = vmul.f32 %v697, 1.442695
      %v722 = vpow.pop %v721
      %v723 = vmul.f32 %v698, 1.442695
      %v724 = vpow.pop %v723
      %v725 = vmul.f32 %v699, 1.442695
      %v726 = vpow.pop %v725
      %v727 = vmul.f32 %v700, 1.442695
      %v728 = vpow.pop %v727
      %v729 = vmul.f32 %v701, 1.442695
      %v730 = vpow.pop %v729
      %v731 = vmul.f32 %v702, 1.442695
      %v732 = vpow.pop %v731
      %v733 = vmul.f32 %v703, 1.442695
      %v734 = vpow.pop %v733
      %v735 = vmul.f32 %v704, 1.442695
      %v736 = vpow.pop %v735
      %738 = vset.pattern.permute.xlu0 0
      %739 = vperm.xlu0 %738, %v673
      %v740 = vpop.permute.xlu0 %739
      %743 = vset.pattern.permute.xlu0 0
      %744 = vperm.xlu0 %743, %v674
      %v745 = vpop.permute.xlu0 %744
      %748 = vset.pattern.permute.xlu0 0
      %749 = vperm.xlu0 %748, %v675
      %v750 = vpop.permute.xlu0 %749
      %753 = vset.pattern.permute.xlu0 0
      %754 = vperm.xlu0 %753, %v676
      %v755 = vpop.permute.xlu0 %754
      %758 = vset.pattern.permute.xlu0 0
      %759 = vperm.xlu0 %758, %v677
      %v760 = vpop.permute.xlu0 %759
      %763 = vset.pattern.permute.xlu0 0
      %764 = vperm.xlu0 %763, %v678
      %v765 = vpop.permute.xlu0 %764
      %768 = vset.pattern.permute.xlu0 0
      %769 = vperm.xlu0 %768, %v679
      %v770 = vpop.permute.xlu0 %769
      %773 = vset.pattern.permute.xlu0 0
      %774 = vperm.xlu0 %773, %v680
      %v775 = vpop.permute.xlu0 %774
      %778 = vset.pattern.permute.xlu0 0
      %779 = vperm.xlu0 %778, %v681
      %v780 = vpop.permute.xlu0 %779
      %783 = vset.pattern.permute.xlu0 0
      %784 = vperm.xlu0 %783, %v682
      %v785 = vpop.permute.xlu0 %784
      %788 = vset.pattern.permute.xlu0 0
      %789 = vperm.xlu0 %788, %v683
      %v790 = vpop.permute.xlu0 %789
      %793 = vset.pattern.permute.xlu0 0
      %794 = vperm.xlu0 %793, %v684
      %v795 = vpop.permute.xlu0 %794
      %798 = vset.pattern.permute.xlu0 0
      %799 = vperm.xlu0 %798, %v685
      %v800 = vpop.permute.xlu0 %799
      %803 = vset.pattern.permute.xlu0 0
      %804 = vperm.xlu0 %803, %v686
      %v805 = vpop.permute.xlu0 %804
      %808 = vset.pattern.permute.xlu0 0
      %809 = vperm.xlu0 %808, %v687
      %v810 = vpop.permute.xlu0 %809
      %813 = vset.pattern.permute.xlu0 0
      %814 = vperm.xlu0 %813, %v688
      %v815 = vpop.permute.xlu0 %814
      %v817 = vsub.f32 %v563, %v740
      %v818 = vsub.f32 %v566, %v745
      %v819 = vsub.f32 %v571, %v750
      %v820 = vsub.f32 %v574, %v755
      %v821 = vsub.f32 %v579, %v760
      %v822 = vsub.f32 %v582, %v765
      %v823 = vsub.f32 %v587, %v770
      %v824 = vsub.f32 %v590, %v775
      %v825 = vsub.f32 %v595, %v780
      %v826 = vsub.f32 %v598, %v785
      %v827 = vsub.f32 %v603, %v790
      %v828 = vsub.f32 %v606, %v795
      %v829 = vsub.f32 %v611, %v800
      %v830 = vsub.f32 %v614, %v805
      %v831 = vsub.f32 %v619, %v810
      %v832 = vsub.f32 %v622, %v815
      %v833 = vmul.f32 %v817, 1.442695
      %v834 = vpow.pop %v833
      %v835 = vmul.f32 %v818, 1.442695
      %v836 = vpow.pop %v835
      %v837 = vmul.f32 %v819, 1.442695
      %v838 = vpow.pop %v837
      %v839 = vmul.f32 %v820, 1.442695
      %v840 = vpow.pop %v839
      %v841 = vmul.f32 %v821, 1.442695
      %v842 = vpow.pop %v841
      %v843 = vmul.f32 %v822, 1.442695
      %v844 = vpow.pop %v843
      %v845 = vmul.f32 %v823, 1.442695
      %v846 = vpow.pop %v845
      %v847 = vmul.f32 %v824, 1.442695
      %v848 = vpow.pop %v847
      %v849 = vmul.f32 %v825, 1.442695
      %v850 = vpow.pop %v849
      %v851 = vmul.f32 %v826, 1.442695
      %v852 = vpow.pop %v851
      %v853 = vmul.f32 %v827, 1.442695
      %v854 = vpow.pop %v853
      %v855 = vmul.f32 %v828, 1.442695
      %v856 = vpow.pop %v855
      %v857 = vmul.f32 %v829, 1.442695
      %v858 = vpow.pop %v857
      %v859 = vmul.f32 %v830, 1.442695
      %v860 = vpow.pop %v859
      %v861 = vmul.f32 %v831, 1.442695
      %v862 = vpow.pop %v861
      %v863 = vmul.f32 %v832, 1.442695
      %v864 = vpow.pop %v863
      %v865 = vld [vmem:[#allocation3] sm:$0xff]
      %v866 = vld [vmem:[#allocation3 + $0x8] sm:$0xff]
      %v867 = vld [vmem:[#allocation3 + $0x10] sm:$0xff]
      %v868 = vld [vmem:[#allocation3 + $0x18] sm:$0xff]
      %v869 = vld [vmem:[#allocation3 + $0x20] sm:$0xff]
      %v870 = vld [vmem:[#allocation3 + $0x28] sm:$0xff]
      %v871 = vld [vmem:[#allocation3 + $0x30] sm:$0xff]
      %v872 = vld [vmem:[#allocation3 + $0x38] sm:$0xff]
      %v873 = vld [vmem:[#allocation3 + $0x40] sm:$0xff]
      %v874 = vld [vmem:[#allocation3 + $0x48] sm:$0xff]
      %v875 = vld [vmem:[#allocation3 + $0x50] sm:$0xff]
      %v876 = vld [vmem:[#allocation3 + $0x58] sm:$0xff]
      %v877 = vld [vmem:[#allocation3 + $0x60] sm:$0xff]
      %v878 = vld [vmem:[#allocation3 + $0x68] sm:$0xff]
      %v879 = vld [vmem:[#allocation3 + $0x70] sm:$0xff]
      %v880 = vld [vmem:[#allocation3 + $0x78] sm:$0xff]
      %v881 = vmul.f32 %v706, %v865
      %v882 = vmul.f32 %v708, %v866
      %v883 = vmul.f32 %v710, %v867
      %v884 = vmul.f32 %v712, %v868
      %v885 = vmul.f32 %v714, %v869
      %v886 = vmul.f32 %v716, %v870
      %v887 = vmul.f32 %v718, %v871
      %v888 = vmul.f32 %v720, %v872
      %v889 = vmul.f32 %v722, %v873
      %v890 = vmul.f32 %v724, %v874
      %v891 = vmul.f32 %v726, %v875
      %v892 = vmul.f32 %v728, %v876
      %v893 = vmul.f32 %v730, %v877
      %v894 = vmul.f32 %v732, %v878
      %v895 = vmul.f32 %v734, %v879
      %v896 = vmul.f32 %v736, %v880
      %897 = vadd.xlane.f32.xlu0 %v834
      %v898 = vpop.xlane.xlu0 %897
      %899 = vadd.xlane.f32.xlu0 %v836
      %v900 = vpop.xlane.xlu0 %899
      %901 = vadd.xlane.f32.xlu0 %v838
      %v902 = vpop.xlane.xlu0 %901
      %903 = vadd.xlane.f32.xlu0 %v840
      %v904 = vpop.xlane.xlu0 %903
      %905 = vadd.xlane.f32.xlu0 %v842
      %v906 = vpop.xlane.xlu0 %905
      %907 = vadd.xlane.f32.xlu0 %v844
      %v908 = vpop.xlane.xlu0 %907
      %909 = vadd.xlane.f32.xlu0 %v846
      %v910 = vpop.xlane.xlu0 %909
      %911 = vadd.xlane.f32.xlu0 %v848
      %v912 = vpop.xlane.xlu0 %911
      %913 = vadd.xlane.f32.xlu0 %v850
      %v914 = vpop.xlane.xlu0 %913
      %915 = vadd.xlane.f32.xlu0 %v852
      %v916 = vpop.xlane.xlu0 %915
      %917 = vadd.xlane.f32.xlu0 %v854
      %v918 = vpop.xlane.xlu0 %917
      %919 = vadd.xlane.f32.xlu0 %v856
      %v920 = vpop.xlane.xlu0 %919
      %921 = vadd.xlane.f32.xlu0 %v858
      %v922 = vpop.xlane.xlu0 %921
      %923 = vadd.xlane.f32.xlu0 %v860
      %v924 = vpop.xlane.xlu0 %923
      %925 = vadd.xlane.f32.xlu0 %v862
      %v926 = vpop.xlane.xlu0 %925
      %927 = vadd.xlane.f32.xlu0 %v864
      %v928 = vpop.xlane.xlu0 %927
      %v929 = vadd.f32 %v881, %v898
      %v930 = vadd.f32 %v882, %v900
      %v931 = vadd.f32 %v883, %v902
      %v932 = vadd.f32 %v884, %v904
      %v933 = vadd.f32 %v885, %v906
      %v934 = vadd.f32 %v886, %v908
      %v935 = vadd.f32 %v887, %v910
      %v936 = vadd.f32 %v888, %v912
      %v937 = vadd.f32 %v889, %v914
      %v938 = vadd.f32 %v890, %v916
      %v939 = vadd.f32 %v891, %v918
      %v940 = vadd.f32 %v892, %v920
      %v941 = vadd.f32 %v893, %v922
      %v942 = vadd.f32 %v894, %v924
      %v943 = vadd.f32 %v895, %v926
      %v944 = vadd.f32 %v896, %v928
      %vm945 = vcmask 7168
      %946 = vst.msk [vmem:[#allocation3] sm:$0xff] %vm945, %v929
      %947 = vst.msk [vmem:[#allocation3 + $0x8] sm:$0xff] %vm945, %v930
      %948 = vst.msk [vmem:[#allocation3 + $0x10] sm:$0xff] %vm945, %v931
      %949 = vst.msk [vmem:[#allocation3 + $0x18] sm:$0xff] %vm945, %v932
      %950 = vst.msk [vmem:[#allocation3 + $0x20] sm:$0xff] %vm945, %v933
      %951 = vst.msk [vmem:[#allocation3 + $0x28] sm:$0xff] %vm945, %v934
      %952 = vst.msk [vmem:[#allocation3 + $0x30] sm:$0xff] %vm945, %v935
      %953 = vst.msk [vmem:[#allocation3 + $0x38] sm:$0xff] %vm945, %v936
      %954 = vst.msk [vmem:[#allocation3 + $0x40] sm:$0xff] %vm945, %v937
      %955 = vst.msk [vmem:[#allocation3 + $0x48] sm:$0xff] %vm945, %v938
      %956 = vst.msk [vmem:[#allocation3 + $0x50] sm:$0xff] %vm945, %v939
      %957 = vst.msk [vmem:[#allocation3 + $0x58] sm:$0xff] %vm945, %v940
      %958 = vst.msk [vmem:[#allocation3 + $0x60] sm:$0xff] %vm945, %v941
      %959 = vst.msk [vmem:[#allocation3 + $0x68] sm:$0xff] %vm945, %v942
      %960 = vst.msk [vmem:[#allocation3 + $0x70] sm:$0xff] %vm945, %v943
      %961 = vst.msk [vmem:[#allocation3 + $0x78] sm:$0xff] %vm945, %v944
      %v962 = vld [vmem:[#allocation4] sm:$0xff]
      %v963 = vld [vmem:[#allocation4 + $0x8] sm:$0xff]
      %v964 = vld [vmem:[#allocation4 + $0x10] sm:$0xff]
      %v965 = vld [vmem:[#allocation4 + $0x18] sm:$0xff]
      %v966 = vld [vmem:[#allocation4 + $0x20] sm:$0xff]
      %v967 = vld [vmem:[#allocation4 + $0x28] sm:$0xff]
      %v968 = vld [vmem:[#allocation4 + $0x30] sm:$0xff]
      %v969 = vld [vmem:[#allocation4 + $0x38] sm:$0xff]
      %v970 = vld [vmem:[#allocation4 + $0x40] sm:$0xff]
      %v971 = vld [vmem:[#allocation4 + $0x48] sm:$0xff]
      %v972 = vld [vmem:[#allocation4 + $0x50] sm:$0xff]
      %v973 = vld [vmem:[#allocation4 + $0x58] sm:$0xff]
      %v974 = vld [vmem:[#allocation4 + $0x60] sm:$0xff]
      %v975 = vld [vmem:[#allocation4 + $0x68] sm:$0xff]
      %v976 = vld [vmem:[#allocation4 + $0x70] sm:$0xff]
      %v977 = vld [vmem:[#allocation4 + $0x78] sm:$0xff]
      %979 = vset.pattern.permute.xlu0 0
      %980 = vperm.xlu0 %979, %v706
      %v981 = vpop.permute.xlu0 %980
      %984 = vset.pattern.permute.xlu0 0
      %985 = vperm.xlu0 %984, %v708
      %v986 = vpop.permute.xlu0 %985
      %989 = vset.pattern.permute.xlu0 0
      %990 = vperm.xlu0 %989, %v710
      %v991 = vpop.permute.xlu0 %990
      %994 = vset.pattern.permute.xlu0 0
      %995 = vperm.xlu0 %994, %v712
      %v996 = vpop.permute.xlu0 %995
      %999 = vset.pattern.permute.xlu0 0
      %1000 = vperm.xlu0 %999, %v714
      %v1001 = vpop.permute.xlu0 %1000
      %1004 = vset.pattern.permute.xlu0 0
      %1005 = vperm.xlu0 %1004, %v716
      %v1006 = vpop.permute.xlu0 %1005
      %1009 = vset.pattern.permute.xlu0 0
      %1010 = vperm.xlu0 %1009, %v718
      %v1011 = vpop.permute.xlu0 %1010
      %1014 = vset.pattern.permute.xlu0 0
      %1015 = vperm.xlu0 %1014, %v720
      %v1016 = vpop.permute.xlu0 %1015
      %1019 = vset.pattern.permute.xlu0 0
      %1020 = vperm.xlu0 %1019, %v722
      %v1021 = vpop.permute.xlu0 %1020
      %1024 = vset.pattern.permute.xlu0 0
      %1025 = vperm.xlu0 %1024, %v724
      %v1026 = vpop.permute.xlu0 %1025
      %1029 = vset.pattern.permute.xlu0 0
      %1030 = vperm.xlu0 %1029, %v726
      %v1031 = vpop.permute.xlu0 %1030
      %1034 = vset.pattern.permute.xlu0 0
      %1035 = vperm.xlu0 %1034, %v728
      %v1036 = vpop.permute.xlu0 %1035
      %1039 = vset.pattern.permute.xlu0 0
      %1040 = vperm.xlu0 %1039, %v730
      %v1041 = vpop.permute.xlu0 %1040
      %1044 = vset.pattern.permute.xlu0 0
      %1045 = vperm.xlu0 %1044, %v732
      %v1046 = vpop.permute.xlu0 %1045
      %1049 = vset.pattern.permute.xlu0 0
      %1050 = vperm.xlu0 %1049, %v734
      %v1051 = vpop.permute.xlu0 %1050
      %1054 = vset.pattern.permute.xlu0 0
      %1055 = vperm.xlu0 %1054, %v736
      %v1056 = vpop.permute.xlu0 %1055
      %v1058 = vmul.f32 %v981, %v962
      %v1059 = vmul.f32 %v986, %v963
      %v1060 = vmul.f32 %v991, %v964
      %v1061 = vmul.f32 %v996, %v965
      %v1062 = vmul.f32 %v1001, %v966
      %v1063 = vmul.f32 %v1006, %v967
      %v1064 = vmul.f32 %v1011, %v968
      %v1065 = vmul.f32 %v1016, %v969
      %v1066 = vmul.f32 %v1021, %v970
      %v1067 = vmul.f32 %v1026, %v971
      %v1068 = vmul.f32 %v1031, %v972
      %v1069 = vmul.f32 %v1036, %v973
      %v1070 = vmul.f32 %v1041, %v974
      %v1071 = vmul.f32 %v1046, %v975
      %v1072 = vmul.f32 %v1051, %v976
      %v1073 = vmul.f32 %v1056, %v977
      %v1074 = vpack.c.bf16 %v836, %v834
      %v1075 = vpack.c.bf16 %v840, %v838
      %v1076 = vpack.c.bf16 %v844, %v842
      %v1077 = vpack.c.bf16 %v848, %v846
      %v1078 = vpack.c.bf16 %v852, %v850
      %v1079 = vpack.c.bf16 %v856, %v854
      %v1080 = vpack.c.bf16 %v860, %v858
      %v1081 = vpack.c.bf16 %v864, %v862
      %v1082 = vunpack.c.h.b16 %v400
      %v1083 = vunpack.c.h.b16 %v401
      %v1084 = vunpack.c.h.b16 %v402
      %v1085 = vunpack.c.h.b16 %v403
      %v1086 = vunpack.c.h.b16 %v404
      %v1087 = vunpack.c.h.b16 %v405
      %v1088 = vunpack.c.h.b16 %v406
      %v1089 = vunpack.c.h.b16 %v407
      %v1090 = vunpack.c.h.b16 %v408
      %v1091 = vunpack.c.h.b16 %v409
      %v1092 = vunpack.c.h.b16 %v410
      %v1093 = vunpack.c.h.b16 %v411
      %v1094 = vunpack.c.h.b16 %v412
      %v1095 = vunpack.c.h.b16 %v413
      %v1096 = vunpack.c.h.b16 %v414
      %v1097 = vunpack.c.h.b16 %v415
      %v1098 = vpack.c.b16 %v1083, %v1082
      %v1099 = vpack.c.b16 %v1085, %v1084
      %v1100 = vpack.c.b16 %v1087, %v1086
      %v1101 = vpack.c.b16 %v1089, %v1088
      %v1102 = vpack.c.b16 %v1091, %v1090
      %v1103 = vpack.c.b16 %v1093, %v1092
      %v1104 = vpack.c.b16 %v1095, %v1094
      %v1105 = vpack.c.b16 %v1097, %v1096
      %1114 = vmatprep.subr.bf16.mxu0 0
      %1115 = vmatpush1.bf16.msra.mxu0 %v1098
      %1116 = vmatprep.subr.bf16.mxu0 0
      %1117 = vmatpush1.bf16.msra.mxu0 %v1099
      %1118 = vmatprep.subr.bf16.mxu0 0
      %1119 = vmatpush1.bf16.msra.mxu0 %v1100
      %1120 = vmatprep.subr.bf16.mxu0 0
      %1121 = vmatpush1.bf16.msra.mxu0 %v1101
      %1122 = vmatprep.subr.bf16.mxu0 0
      %1123 = vmatpush1.bf16.msra.mxu0 %v1102
      %1124 = vmatprep.subr.bf16.mxu0 0
      %1125 = vmatpush1.bf16.msra.mxu0 %v1103
      %1126 = vmatprep.subr.bf16.mxu0 0
      %1127 = vmatpush1.bf16.msra.mxu0 %v1104
      %1128 = vmatprep.subr.bf16.mxu0 0
      %1129 = vmatpush1.bf16.msra.mxu0 %v1105
      %1130 = vmatprep.subr.bf16.mxu0 0
      %1131 = vmatpush1.bf16.msra.mxu0 0
      %1132 = vmatprep.subr.bf16.mxu0 0
      %1133 = vmatpush1.bf16.msra.mxu0 0
      %1134 = vmatprep.subr.bf16.mxu0 0
      %1135 = vmatpush1.bf16.msra.mxu0 0
      %1136 = vmatprep.subr.bf16.mxu0 0
      %1137 = vmatpush1.bf16.msra.mxu0 0
      %1138 = vmatprep.subr.bf16.mxu0 0
      %1139 = vmatpush1.bf16.msra.mxu0 0
      %1140 = vmatprep.subr.bf16.mxu0 0
      %1141 = vmatpush1.bf16.msra.mxu0 0
      %1142 = vmatprep.subr.bf16.mxu0 0
      %1143 = vmatpush1.bf16.msra.mxu0 0
      %1144 = vmatprep.subr.bf16.mxu0 0
      %1145 = vmatpush1.bf16.msra.mxu0 0
      %1146 = vmatprep.mubr.bf16.mxu0 0
      %1147 = vmatmul.mubr.bf16.gmra.mrb[0].mxu0 %v1074
      %v1148 = vpop.f32.mrb[0].mxu0
      %v1149 = vadd.f32 0.0, %v1148
      %v1150 = vpop.f32.mrb[0].mxu0
      %v1151 = vpop.f32.mrb[0].mxu0
      %v1152 = vadd.f32 0.0, %v1151
      %v1153 = vpop.f32.mrb[0].mxu0
      %1154 = vmatprep.mubr.bf16.mxu0 0
      %1155 = vmatmul.mubr.bf16.gmra.mrb[0].mxu0 %v1075
      %v1156 = vpop.f32.mrb[0].mxu0
      %v1157 = vadd.f32 0.0, %v1156
      %v1158 = vpop.f32.mrb[0].mxu0
      %v1159 = vpop.f32.mrb[0].mxu0
      %v1160 = vadd.f32 0.0, %v1159
      %v1161 = vpop.f32.mrb[0].mxu0
      %1162 = vmatprep.mubr.bf16.mxu0 0
      %1163 = vmatmul.mubr.bf16.gmra.mrb[0].mxu0 %v1076
      %v1164 = vpop.f32.mrb[0].mxu0
      %v1165 = vadd.f32 0.0, %v1164
      %v1166 = vpop.f32.mrb[0].mxu0
      %v1167 = vpop.f32.mrb[0].mxu0
      %v1168 = vadd.f32 0.0, %v1167
      %v1169 = vpop.f32.mrb[0].mxu0
      %1170 = vmatprep.mubr.bf16.mxu0 0
      %1171 = vmatmul.mubr.bf16.gmra.mrb[0].mxu0 %v1077
      %v1172 = vpop.f32.mrb[0].mxu0
      %v1173 = vadd.f32 0.0, %v1172
      %v1174 = vpop.f32.mrb[0].mxu0
      %v1175 = vpop.f32.mrb[0].mxu0
      %v1176 = vadd.f32 0.0, %v1175
      %v1177 = vpop.f32.mrb[0].mxu0
      %1178 = vmatprep.mubr.bf16.mxu0 0
      %1179 = vmatmul.mubr.bf16.gmra.mrb[0].mxu0 %v1078
      %v1180 = vpop.f32.mrb[0].mxu0
      %v1181 = vadd.f32 0.0, %v1180
      %v1182 = vpop.f32.mrb[0].mxu0
      %v1183 = vpop.f32.mrb[0].mxu0
      %v1184 = vadd.f32 0.0, %v1183
      %v1185 = vpop.f32.mrb[0].mxu0
      %1186 = vmatprep.mubr.bf16.mxu0 0
      %1187 = vmatmul.mubr.bf16.gmra.mrb[0].mxu0 %v1079
      %v1188 = vpop.f32.mrb[0].mxu0
      %v1189 = vadd.f32 0.0, %v1188
      %v1190 = vpop.f32.mrb[0].mxu0
      %v1191 = vpop.f32.mrb[0].mxu0
      %v1192 = vadd.f32 0.0, %v1191
      %v1193 = vpop.f32.mrb[0].mxu0
      %1194 = vmatprep.mubr.bf16.mxu0 0
      %1195 = vmatmul.mubr.bf16.gmra.mrb[0].mxu0 %v1080
      %v1196 = vpop.f32.mrb[0].mxu0
      %v1197 = vadd.f32 0.0, %v1196
      %v1198 = vpop.f32.mrb[0].mxu0
      %v1199 = vpop.f32.mrb[0].mxu0
      %v1200 = vadd.f32 0.0, %v1199
      %v1201 = vpop.f32.mrb[0].mxu0
      %1202 = vmatprep.mubr.bf16.mxu0 0
      %1203 = vmatmul.mubr.bf16.gmra.mrb[0].mxu0 %v1081
      %v1204 = vpop.f32.mrb[0].mxu0
      %v1205 = vadd.f32 0.0, %v1204
      %v1206 = vpop.f32.mrb[0].mxu0
      %v1207 = vpop.f32.mrb[0].mxu0
      %v1208 = vadd.f32 0.0, %v1207
      %v1209 = vpop.f32.mrb[0].mxu0
      %1210 = vdwg.mxu0
      %v1211 = vadd.f32 %v1058, %v1149
      %v1212 = vadd.f32 %v1059, %v1152
      %v1213 = vadd.f32 %v1060, %v1157
      %v1214 = vadd.f32 %v1061, %v1160
      %v1215 = vadd.f32 %v1062, %v1165
      %v1216 = vadd.f32 %v1063, %v1168
      %v1217 = vadd.f32 %v1064, %v1173
      %v1218 = vadd.f32 %v1065, %v1176
      %v1219 = vadd.f32 %v1066, %v1181
      %v1220 = vadd.f32 %v1067, %v1184
      %v1221 = vadd.f32 %v1068, %v1189
      %v1222 = vadd.f32 %v1069, %v1192
      %v1223 = vadd.f32 %v1070, %v1197
      %v1224 = vadd.f32 %v1071, %v1200
      %v1225 = vadd.f32 %v1072, %v1205
      %v1226 = vadd.f32 %v1073, %v1208
      %1227 = vst [vmem:[#allocation4] sm:$0xff] %v1211
      %1228 = vst [vmem:[#allocation4 + $0x8] sm:$0xff] %v1212
      %1229 = vst [vmem:[#allocation4 + $0x10] sm:$0xff] %v1213
      %1230 = vst [vmem:[#allocation4 + $0x18] sm:$0xff] %v1214
      %1231 = vst [vmem:[#allocation4 + $0x20] sm:$0xff] %v1215
      %1232 = vst [vmem:[#allocation4 + $0x28] sm:$0xff] %v1216
      %1233 = vst [vmem:[#allocation4 + $0x30] sm:$0xff] %v1217
      %1234 = vst [vmem:[#allocation4 + $0x38] sm:$0xff] %v1218
      %1235 = vst [vmem:[#allocation4 + $0x40] sm:$0xff] %v1219
      %1236 = vst [vmem:[#allocation4 + $0x48] sm:$0xff] %v1220
      %1237 = vst [vmem:[#allocation4 + $0x50] sm:$0xff] %v1221
      %1238 = vst [vmem:[#allocation4 + $0x58] sm:$0xff] %v1222
      %1239 = vst [vmem:[#allocation4 + $0x60] sm:$0xff] %v1223
      %1240 = vst [vmem:[#allocation4 + $0x68] sm:$0xff] %v1224
      %1241 = vst [vmem:[#allocation4 + $0x70] sm:$0xff] %v1225
      %1242 = vst [vmem:[#allocation4 + $0x78] sm:$0xff] %v1226
      %1243 = vst.msk [vmem:[#allocation2] sm:$0xff] %vm945, %v673
      %1244 = vst.msk [vmem:[#allocation2 + $0x8] sm:$0xff] %vm945, %v674
      %1245 = vst.msk [vmem:[#allocation2 + $0x10] sm:$0xff] %vm945, %v675
      %1246 = vst.msk [vmem:[#allocation2 + $0x18] sm:$0xff] %vm945, %v676
      %1247 = vst.msk [vmem:[#allocation2 + $0x20] sm:$0xff] %vm945, %v677
      %1248 = vst.msk [vmem:[#allocation2 + $0x28] sm:$0xff] %vm945, %v678
      %1249 = vst.msk [vmem:[#allocation2 + $0x30] sm:$0xff] %vm945, %v679
      %1250 = vst.msk [vmem:[#allocation2 + $0x38] sm:$0xff] %vm945, %v680
      %1251 = vst.msk [vmem:[#allocation2 + $0x40] sm:$0xff] %vm945, %v681
      %1252 = vst.msk [vmem:[#allocation2 + $0x48] sm:$0xff] %vm945, %v682
      %1253 = vst.msk [vmem:[#allocation2 + $0x50] sm:$0xff] %vm945, %v683
      %1254 = vst.msk [vmem:[#allocation2 + $0x58] sm:$0xff] %vm945, %v684
      %1255 = vst.msk [vmem:[#allocation2 + $0x60] sm:$0xff] %vm945, %v685
      %1256 = vst.msk [vmem:[#allocation2 + $0x68] sm:$0xff] %vm945, %v686
      %1257 = vst.msk [vmem:[#allocation2 + $0x70] sm:$0xff] %vm945, %v687
      %1258 = vst.msk [vmem:[#allocation2 + $0x78] sm:$0xff] %vm945, %v688
      %p1259 = scmp.eq.s32.totalorder %s23, 1
      // Predicated region
      $region45: #{nonlocal_block.3} parent=39 // pred_check
        %p1260 = pneg %p1259
      $region46: #{nonlocal_block.3} parent=39 // pred_check_branch
        %1262 = sbr.rel (%p1260) target = $region48
      $region47: #{nonlocal_block.3} parent=39 // pred_region
        %v1263 = vld [vmem:[#allocation4] sm:$0xff]
        %v1264 = vld [vmem:[#allocation4 + $0x8] sm:$0xff]
        %v1265 = vld [vmem:[#allocation4 + $0x10] sm:$0xff]
        %v1266 = vld [vmem:[#allocation4 + $0x18] sm:$0xff]
        %v1267 = vld [vmem:[#allocation4 + $0x20] sm:$0xff]
        %v1268 = vld [vmem:[#allocation4 + $0x28] sm:$0xff]
        %v1269 = vld [vmem:[#allocation4 + $0x30] sm:$0xff]
        %v1270 = vld [vmem:[#allocation4 + $0x38] sm:$0xff]
        %v1271 = vld [vmem:[#allocation4 + $0x40] sm:$0xff]
        %v1272 = vld [vmem:[#allocation4 + $0x48] sm:$0xff]
        %v1273 = vld [vmem:[#allocation4 + $0x50] sm:$0xff]
        %v1274 = vld [vmem:[#allocation4 + $0x58] sm:$0xff]
        %v1275 = vld [vmem:[#allocation4 + $0x60] sm:$0xff]
        %v1276 = vld [vmem:[#allocation4 + $0x68] sm:$0xff]
        %v1277 = vld [vmem:[#allocation4 + $0x70] sm:$0xff]
        %v1278 = vld [vmem:[#allocation4 + $0x78] sm:$0xff]
        %v1279 = vld [vmem:[#allocation3] sm:$0xff]
        %v1280 = vld [vmem:[#allocation3 + $0x8] sm:$0xff]
        %v1281 = vld [vmem:[#allocation3 + $0x10] sm:$0xff]
        %v1282 = vld [vmem:[#allocation3 + $0x18] sm:$0xff]
        %v1283 = vld [vmem:[#allocation3 + $0x20] sm:$0xff]
        %v1284 = vld [vmem:[#allocation3 + $0x28] sm:$0xff]
        %v1285 = vld [vmem:[#allocation3 + $0x30] sm:$0xff]
        %v1286 = vld [vmem:[#allocation3 + $0x38] sm:$0xff]
        %v1287 = vld [vmem:[#allocation3 + $0x40] sm:$0xff]
        %v1288 = vld [vmem:[#allocation3 + $0x48] sm:$0xff]
        %v1289 = vld [vmem:[#allocation3 + $0x50] sm:$0xff]
        %v1290 = vld [vmem:[#allocation3 + $0x58] sm:$0xff]
        %v1291 = vld [vmem:[#allocation3 + $0x60] sm:$0xff]
        %v1292 = vld [vmem:[#allocation3 + $0x68] sm:$0xff]
        %v1293 = vld [vmem:[#allocation3 + $0x70] sm:$0xff]
        %v1294 = vld [vmem:[#allocation3 + $0x78] sm:$0xff]
        %v1295 = vrcp.pop %v1279
        %v1296 = vrcp.pop %v1280
        %v1297 = vrcp.pop %v1281
        %v1298 = vrcp.pop %v1282
        %v1299 = vrcp.pop %v1283
        %v1300 = vrcp.pop %v1284
        %v1301 = vrcp.pop %v1285
        %v1302 = vrcp.pop %v1286
        %v1303 = vrcp.pop %v1287
        %v1304 = vrcp.pop %v1288
        %v1305 = vrcp.pop %v1289
        %v1306 = vrcp.pop %v1290
        %v1307 = vrcp.pop %v1291
        %v1308 = vrcp.pop %v1292
        %v1309 = vrcp.pop %v1293
        %v1310 = vrcp.pop %v1294
        %1312 = vset.pattern.permute.xlu0 0
        %1313 = vperm.xlu0 %1312, %v1295
        %v1314 = vpop.permute.xlu0 %1313
        %1317 = vset.pattern.permute.xlu0 0
        %1318 = vperm.xlu0 %1317, %v1296
        %v1319 = vpop.permute.xlu0 %1318
        %1322 = vset.pattern.permute.xlu0 0
        %1323 = vperm.xlu0 %1322, %v1297
        %v1324 = vpop.permute.xlu0 %1323
        %1327 = vset.pattern.permute.xlu0 0
        %1328 = vperm.xlu0 %1327, %v1298
        %v1329 = vpop.permute.xlu0 %1328
        %1332 = vset.pattern.permute.xlu0 0
        %1333 = vperm.xlu0 %1332, %v1299
        %v1334 = vpop.permute.xlu0 %1333
        %1337 = vset.pattern.permute.xlu0 0
        %1338 = vperm.xlu0 %1337, %v1300
        %v1339 = vpop.permute.xlu0 %1338
        %1342 = vset.pattern.permute.xlu0 0
        %1343 = vperm.xlu0 %1342, %v1301
        %v1344 = vpop.permute.xlu0 %1343
        %1347 = vset.pattern.permute.xlu0 0
        %1348 = vperm.xlu0 %1347, %v1302
        %v1349 = vpop.permute.xlu0 %1348
        %1352 = vset.pattern.permute.xlu0 0
        %1353 = vperm.xlu0 %1352, %v1303
        %v1354 = vpop.permute.xlu0 %1353
        %1357 = vset.pattern.permute.xlu0 0
        %1358 = vperm.xlu0 %1357, %v1304
        %v1359 = vpop.permute.xlu0 %1358
        %1362 = vset.pattern.permute.xlu0 0
        %1363 = vperm.xlu0 %1362, %v1305
        %v1364 = vpop.permute.xlu0 %1363
        %1367 = vset.pattern.permute.xlu0 0
        %1368 = vperm.xlu0 %1367, %v1306
        %v1369 = vpop.permute.xlu0 %1368
        %1372 = vset.pattern.permute.xlu0 0
        %1373 = vperm.xlu0 %1372, %v1307
        %v1374 = vpop.permute.xlu0 %1373
        %1377 = vset.pattern.permute.xlu0 0
        %1378 = vperm.xlu0 %1377, %v1308
        %v1379 = vpop.permute.xlu0 %1378
        %1382 = vset.pattern.permute.xlu0 0
        %1383 = vperm.xlu0 %1382, %v1309
        %v1384 = vpop.permute.xlu0 %1383
        %1387 = vset.pattern.permute.xlu0 0
        %1388 = vperm.xlu0 %1387, %v1310
        %v1389 = vpop.permute.xlu0 %1388
        %v1391 = vmul.f32 %v1263, %v1314
        %v1392 = vmul.f32 %v1264, %v1319
        %v1393 = vmul.f32 %v1265, %v1324
        %v1394 = vmul.f32 %v1266, %v1329
        %v1395 = vmul.f32 %v1267, %v1334
        %v1396 = vmul.f32 %v1268, %v1339
        %v1397 = vmul.f32 %v1269, %v1344
        %v1398 = vmul.f32 %v1270, %v1349
        %v1399 = vmul.f32 %v1271, %v1354
        %v1400 = vmul.f32 %v1272, %v1359
        %v1401 = vmul.f32 %v1273, %v1364
        %v1402 = vmul.f32 %v1274, %v1369
        %v1403 = vmul.f32 %v1275, %v1374
        %v1404 = vmul.f32 %v1276, %v1379
        %v1405 = vmul.f32 %v1277, %v1384
        %v1406 = vmul.f32 %v1278, %v1389
        %v1407 = vpack.c.bf16 %v1392, %v1391
        %v1408 = vpack.c.bf16 %v1394, %v1393
        %v1409 = vpack.c.bf16 %v1396, %v1395
        %v1410 = vpack.c.bf16 %v1398, %v1397
        %v1411 = vpack.c.bf16 %v1400, %v1399
        %v1412 = vpack.c.bf16 %v1402, %v1401
        %v1413 = vpack.c.bf16 %v1404, %v1403
        %v1414 = vpack.c.bf16 %v1406, %v1405
        %v1415 = vld [vmem:[%s3] sm:$0xf]
        %v1416 = vld [vmem:[%s3 + $0x4] sm:$0xf]
        %v1417 = vld [vmem:[%s3 + $0x8] sm:$0xf]
        %v1418 = vld [vmem:[%s3 + $0xc] sm:$0xf]
        %v1419 = vld [vmem:[%s3 + $0x10] sm:$0xf]
        %v1420 = vld [vmem:[%s3 + $0x14] sm:$0xf]
        %v1421 = vld [vmem:[%s3 + $0x18] sm:$0xf]
        %v1422 = vld [vmem:[%s3 + $0x1c] sm:$0xf]
        %v1423 = vld [vmem:[%s3 + $0x20] sm:$0xf]
        %v1424 = vld [vmem:[%s3 + $0x24] sm:$0xf]
        %v1425 = vld [vmem:[%s3 + $0x28] sm:$0xf]
        %v1426 = vld [vmem:[%s3 + $0x2c] sm:$0xf]
        %v1427 = vld [vmem:[%s3 + $0x30] sm:$0xf]
        %v1428 = vld [vmem:[%s3 + $0x34] sm:$0xf]
        %v1429 = vld [vmem:[%s3 + $0x38] sm:$0xf]
        %v1430 = vld [vmem:[%s3 + $0x3c] sm:$0xf]
        %v1431 = vld [vmem:[%s4] sm:$0x1]
        %v1433 = vlaneseq
        %v1434 = vshrl.u32 %v1433, 7
        %v1435 = vsub.s32 0, %v1434
        %v1436 = vrot.slane %v1431, %v1435
        %v1454 = vunpack.c.l.b16 %v1415
        %v1455 = vunpack.c.l.b16 %v1416
        %v1456 = vunpack.c.l.b16 %v1417
        %v1457 = vunpack.c.l.b16 %v1418
        %v1458 = vunpack.c.l.b16 %v1419
        %v1459 = vunpack.c.l.b16 %v1420
        %v1460 = vunpack.c.l.b16 %v1421
        %v1461 = vunpack.c.l.b16 %v1422
        %v1462 = vunpack.c.l.b16 %v1423
        %v1463 = vunpack.c.l.b16 %v1424
        %v1464 = vunpack.c.l.b16 %v1425
        %v1465 = vunpack.c.l.b16 %v1426
        %v1466 = vunpack.c.l.b16 %v1427
        %v1467 = vunpack.c.l.b16 %v1428
        %v1468 = vunpack.c.l.b16 %v1429
        %v1469 = vunpack.c.l.b16 %v1430
        %v1470 = vpack.c.b16 %v1455, %v1454
        %v1471 = vpack.c.b16 %v1457, %v1456
        %v1472 = vpack.c.b16 %v1459, %v1458
        %v1473 = vpack.c.b16 %v1461, %v1460
        %v1474 = vpack.c.b16 %v1463, %v1462
        %v1475 = vpack.c.b16 %v1465, %v1464
        %v1476 = vpack.c.b16 %v1467, %v1466
        %v1477 = vpack.c.b16 %v1469, %v1468
        %1486 = vmatprep.subr.bf16.mxu0 0
        %1487 = vmatpush1.bf16.msra.mxu0 %v1470
        %1488 = vmatprep.subr.bf16.mxu0 0
        %1489 = vmatpush1.bf16.msra.mxu0 %v1471
        %1490 = vmatprep.subr.bf16.mxu0 0
        %1491 = vmatpush1.bf16.msra.mxu0 %v1472
        %1492 = vmatprep.subr.bf16.mxu0 0
        %1493 = vmatpush1.bf16.msra.mxu0 %v1473
        %1494 = vmatprep.subr.bf16.mxu0 0
        %1495 = vmatpush1.bf16.msra.mxu0 %v1474
        %1496 = vmatprep.subr.bf16.mxu0 0
        %1497 = vmatpush1.bf16.msra.mxu0 %v1475
        %1498 = vmatprep.subr.bf16.mxu0 0
        %1499 = vmatpush1.bf16.msra.mxu0 %v1476
        %1500 = vmatprep.subr.bf16.mxu0 0
        %1501 = vmatpush1.bf16.msra.mxu0 %v1477
        %1502 = vmatprep.subr.bf16.mxu0 0
        %1503 = vmatpush1.bf16.msra.mxu0 0
        %1504 = vmatprep.subr.bf16.mxu0 0
        %1505 = vmatpush1.bf16.msra.mxu0 0
        %1506 = vmatprep.subr.bf16.mxu0 0
        %1507 = vmatpush1.bf16.msra.mxu0 0
        %1508 = vmatprep.subr.bf16.mxu0 0
        %1509 = vmatpush1.bf16.msra.mxu0 0
        %1510 = vmatprep.subr.bf16.mxu0 0
        %1511 = vmatpush1.bf16.msra.mxu0 0
        %1512 = vmatprep.subr.bf16.mxu0 0
        %1513 = vmatpush1.bf16.msra.mxu0 0
        %1514 = vmatprep.subr.bf16.mxu0 0
        %1515 = vmatpush1.bf16.msra.mxu0 0
        %1516 = vmatprep.subr.bf16.mxu0 0
        %1517 = vmatpush1.bf16.msra.mxu0 0
        %1518 = vmatprep.mubr.bf16.mxu0 0
        %1519 = vmatmul.mubr.bf16.gmra.mrb[0].mxu0 %v1407
        %v1520 = vpop.f32.mrb[0].mxu0
        %v1521 = vadd.f32 %v1436, %v1520
        %v1522 = vpop.f32.mrb[0].mxu0
        %v1523 = vpop.f32.mrb[0].mxu0
        %v1524 = vadd.f32 %v1436, %v1523
        %v1525 = vpop.f32.mrb[0].mxu0
        %1526 = vmatprep.mubr.bf16.mxu0 0
        %1527 = vmatmul.mubr.bf16.gmra.mrb[0].mxu0 %v1408
        %v1528 = vpop.f32.mrb[0].mxu0
        %v1529 = vadd.f32 %v1436, %v1528
        %v1530 = vpop.f32.mrb[0].mxu0
        %v1531 = vpop.f32.mrb[0].mxu0
        %v1532 = vadd.f32 %v1436, %v1531
        %v1533 = vpop.f32.mrb[0].mxu0
        %1534 = vmatprep.mubr.bf16.mxu0 0
        %1535 = vmatmul.mubr.bf16.gmra.mrb[0].mxu0 %v1409
        %v1536 = vpop.f32.mrb[0].mxu0
        %v1537 = vadd.f32 %v1436, %v1536
        %v1538 = vpop.f32.mrb[0].mxu0
        %v1539 = vpop.f32.mrb[0].mxu0
        %v1540 = vadd.f32 %v1436, %v1539
        %v1541 = vpop.f32.mrb[0].mxu0
        %1542 = vmatprep.mubr.bf16.mxu0 0
        %1543 = vmatmul.mubr.bf16.gmra.mrb[0].mxu0 %v1410
        %v1544 = vpop.f32.mrb[0].mxu0
        %v1545 = vadd.f32 %v1436, %v1544
        %v1546 = vpop.f32.mrb[0].mxu0
        %v1547 = vpop.f32.mrb[0].mxu0
        %v1548 = vadd.f32 %v1436, %v1547
        %v1549 = vpop.f32.mrb[0].mxu0
        %1550 = vmatprep.mubr.bf16.mxu0 0
        %1551 = vmatmul.mubr.bf16.gmra.mrb[0].mxu0 %v1411
        %v1552 = vpop.f32.mrb[0].mxu0
        %v1553 = vadd.f32 %v1436, %v1552
        %v1554 = vpop.f32.mrb[0].mxu0
        %v1555 = vpop.f32.mrb[0].mxu0
        %v1556 = vadd.f32 %v1436, %v1555
        %v1557 = vpop.f32.mrb[0].mxu0
        %1558 = vmatprep.mubr.bf16.mxu0 0
        %1559 = vmatmul.mubr.bf16.gmra.mrb[0].mxu0 %v1412
        %v1560 = vpop.f32.mrb[0].mxu0
        %v1561 = vadd.f32 %v1436, %v1560
        %v1562 = vpop.f32.mrb[0].mxu0
        %v1563 = vpop.f32.mrb[0].mxu0
        %v1564 = vadd.f32 %v1436, %v1563
        %v1565 = vpop.f32.mrb[0].mxu0
        %1566 = vmatprep.mubr.bf16.mxu0 0
        %1567 = vmatmul.mubr.bf16.gmra.mrb[0].mxu0 %v1413
        %v1568 = vpop.f32.mrb[0].mxu0
        %v1569 = vadd.f32 %v1436, %v1568
        %v1570 = vpop.f32.mrb[0].mxu0
        %v1571 = vpop.f32.mrb[0].mxu0
        %v1572 = vadd.f32 %v1436, %v1571
        %v1573 = vpop.f32.mrb[0].mxu0
        %1574 = vmatprep.mubr.bf16.mxu0 0
        %1575 = vmatmul.mubr.bf16.gmra.mrb[0].mxu0 %v1414
        %v1576 = vpop.f32.mrb[0].mxu0
        %v1577 = vadd.f32 %v1436, %v1576
        %v1578 = vpop.f32.mrb[0].mxu0
        %v1579 = vpop.f32.mrb[0].mxu0
        %v1580 = vadd.f32 %v1436, %v1579
        %v1581 = vpop.f32.mrb[0].mxu0
        %1582 = vdwg.mxu0
        %v1583 = vld [vmem:[%s313] sm:$0xff]
        %v1584 = vld [vmem:[%s313 + $0x8] sm:$0xff]
        %v1585 = vld [vmem:[%s313 + $0x10] sm:$0xff]
        %v1586 = vld [vmem:[%s313 + $0x18] sm:$0xff]
        %v1587 = vld [vmem:[%s313 + $0x20] sm:$0xff]
        %v1588 = vld [vmem:[%s313 + $0x28] sm:$0xff]
        %v1589 = vld [vmem:[%s313 + $0x30] sm:$0xff]
        %v1590 = vld [vmem:[%s313 + $0x38] sm:$0xff]
        %v1591 = vld [vmem:[%s313 + $0x40] sm:$0xff]
        %v1592 = vld [vmem:[%s313 + $0x48] sm:$0xff]
        %v1593 = vld [vmem:[%s313 + $0x50] sm:$0xff]
        %v1594 = vld [vmem:[%s313 + $0x58] sm:$0xff]
        %v1595 = vld [vmem:[%s313 + $0x60] sm:$0xff]
        %v1596 = vld [vmem:[%s313 + $0x68] sm:$0xff]
        %v1597 = vld [vmem:[%s313 + $0x70] sm:$0xff]
        %v1598 = vld [vmem:[%s313 + $0x78] sm:$0xff]
        %v1599 = vadd.f32 %v1521, %v1583
        %v1600 = vadd.f32 %v1524, %v1584
        %v1601 = vadd.f32 %v1529, %v1585
        %v1602 = vadd.f32 %v1532, %v1586
        %v1603 = vadd.f32 %v1537, %v1587
        %v1604 = vadd.f32 %v1540, %v1588
        %v1605 = vadd.f32 %v1545, %v1589
        %v1606 = vadd.f32 %v1548, %v1590
        %v1607 = vadd.f32 %v1553, %v1591
        %v1608 = vadd.f32 %v1556, %v1592
        %v1609 = vadd.f32 %v1561, %v1593
        %v1610 = vadd.f32 %v1564, %v1594
        %v1611 = vadd.f32 %v1569, %v1595
        %v1612 = vadd.f32 %v1572, %v1596
        %v1613 = vadd.f32 %v1577, %v1597
        %v1614 = vadd.f32 %v1580, %v1598
        %1615 = vst [vmem:[%s344] sm:$0xff] %v1599
        %1616 = vst [vmem:[%s344 + $0x8] sm:$0xff] %v1600
        %1617 = vst [vmem:[%s344 + $0x10] sm:$0xff] %v1601
        %1618 = vst [vmem:[%s344 + $0x18] sm:$0xff] %v1602
        %1619 = vst [vmem:[%s344 + $0x20] sm:$0xff] %v1603
        %1620 = vst [vmem:[%s344 + $0x28] sm:$0xff] %v1604
        %1621 = vst [vmem:[%s344 + $0x30] sm:$0xff] %v1605
        %1622 = vst [vmem:[%s344 + $0x38] sm:$0xff] %v1606
        %1623 = vst [vmem:[%s344 + $0x40] sm:$0xff] %v1607
        %1624 = vst [vmem:[%s344 + $0x48] sm:$0xff] %v1608
        %1625 = vst [vmem:[%s344 + $0x50] sm:$0xff] %v1609
        %1626 = vst [vmem:[%s344 + $0x58] sm:$0xff] %v1610
        %1627 = vst [vmem:[%s344 + $0x60] sm:$0xff] %v1611
        %1628 = vst [vmem:[%s344 + $0x68] sm:$0xff] %v1612
        %1629 = vst [vmem:[%s344 + $0x70] sm:$0xff] %v1613
        %1630 = vst [vmem:[%s344 + $0x78] sm:$0xff] %v1614
      $region48: #{nonlocal_block.3} parent=39 // pred_fallthru
        _
      %s1631 = smul.u32 16, %s22
      %p1632 = scmp.lt.s32.totalorder %s21, 1
      %s1633 = scalar_select %p1632, %s21, 1
      %p1634 = scmp.lt.s32.totalorder %s1631, 31
      %s1635 = scalar_select %p1634, %s1631, 31
      %s1636 = smul.addr %s1633, 32
      %s1637 = sadd.s32 %s1635, %s1636
      %s1638 = smul.addr %s1637, 8
      %s1639 = scalar_lea.vmem %s5, %s1638
      // Predicated region
      $region49: #{nonlocal_block.3} parent=39 // pred_check
        %p1640 = pneg %p181
      $region50: #{nonlocal_block.3} parent=39 // pred_check_branch
        %1642 = sbr.rel (%p1640) target = $region52
      $region51: #{nonlocal_block.3} parent=39 // pred_region
        %s1643 = smul.u32 16, %s22
      $region52: #{nonlocal_block.3} parent=39 // pred_fallthru
        _
    $region40: #{nonlocal_block.3} parent=5 // pred_fallthru
      _
    %p1644 = scmp.le.s32.totalorder 2, %s11
    // Predicated region
    $region53: #{nonlocal_block.3} parent=5 // pred_check
      %p1645 = pneg %p1644
    $region54: #{nonlocal_block.3} parent=5 // pred_check_branch
      %1647 = sbr.rel (%p1645) target = $region56
    $region55: #{nonlocal_block.3} parent=5 // pred_region
      %s1648 = ssub.s32 %s11, 2
      // Predicated region
      $region57: #{nonlocal_block.3} parent=55 // pred_check
        %p1649 = pneg %p187
      $region58: #{nonlocal_block.3} parent=55 // pred_check_branch
        %1651 = sbr.rel (%p1649) target = $region60
      $region59: #{nonlocal_block.3} parent=55 // pred_region
        %s1652 = smul.u32 16, %s25
        %p1653 = scmp.lt.s32.totalorder %s24, 1
        %s1654 = scalar_select %p1653, %s24, 1
        %p1655 = scmp.lt.s32.totalorder %s1652, 31
        %s1656 = scalar_select %p1655, %s1652, 31
        %s1657 = smul.addr %s1654, 32
        %s1658 = sadd.s32 %s1656, %s1657
        %s1659 = smul.addr %s1658, 8
        %s1660 = scalar_lea.vmem %s5, %s1659
      $region60: #{nonlocal_block.3} parent=55 // pred_fallthru
        _
    $region56: #{nonlocal_block.3} parent=5 // pred_fallthru
      _
  $region6: #{nonlocal_block.3} parent=0 // loop_footer
    %s15 = sadd.s32 1, %s11
  $region7: #{nonlocal_block.3} parent=0 // loop_footer_branch
    %10 = sbr.rel target = $region3
  $region8: #{nonlocal_block.3} parent=0 // loop_exit
    _

</llo_original>
